<compile_context>
chip_gen: v7x
topology: tpu7x:2x2x1
jax: 0.10.0
libtpu: 0.0.40
codegen_flags: <defaults>
</compile_context>

<pallas_src>
import functools
import numpy as np
import jax
import jax.numpy as jnp
from jax import lax
from jax.experimental import pallas as pl
from jax.experimental.pallas import tpu as pltpu


def _gait_kernel(L, Bt,
                 x_ref, w1_ref, bn1_ref, w2_ref, bn2_ref,
                 wfc1_ref, bfc1_ref, wfc2_ref, bfc2_ref, o_ref):
    f32 = jnp.float32
    C = x_ref.shape[2]
    C1 = w1_ref.shape[2]          # 32
    C2 = w2_ref.shape[2]          # 64
    L1 = L - 2                    # conv1 valid length
    P1 = L1 // 2                  # after pool1
    L2 = P1 - 2                   # conv2 valid length
    P2 = L2 // 2                  # after pool2

    xv = x_ref[...]               # (L, Bt, C), time-major, batch on sublanes

    def tap_dot(v, w):
        # v: (T, Bt, K) -> flatten time*batch into the MXU M dimension.
        T = v.shape[0]
        return jnp.dot(v.reshape(T * Bt, v.shape[2]), w,
                       preferred_element_type=f32)

    # ---- conv1 (kernel_size=3, valid): 3 taps, each a leading-dim slice ----
    acc1 = tap_dot(xv[0:L1], w1_ref[0])
    acc1 += tap_dot(xv[1:L1 + 1], w1_ref[1])
    acc1 += tap_dot(xv[2:L1 + 2], w1_ref[2])
    # bn1 (inference affine; conv bias folded into the shift) + relu
    h1 = jnp.maximum(acc1 * bn1_ref[0:1, :] + bn1_ref[1:2, :], 0.0)   # (L1*Bt, C1)

    # ---- maxpool1d(k=2, s=2): pair-reduce over the untiled time axis ----
    h1 = h1.reshape(L1, Bt, C1)[0:2 * P1].reshape(P1, 2, Bt, C1)
    p1 = jnp.maximum(h1[:, 0], h1[:, 1])                              # (P1, Bt, C1)

    # ---- conv2 + bn2 + relu ----
    acc2 = tap_dot(p1[0:L2], w2_ref[0])
    acc2 += tap_dot(p1[1:L2 + 1], w2_ref[1])
    acc2 += tap_dot(p1[2:L2 + 2], w2_ref[2])
    h2 = jnp.maximum(acc2 * bn2_ref[0:1, :] + bn2_ref[1:2, :], 0.0)   # (L2*Bt, C2)

    # ---- maxpool1d(k=2, s=2) ----
    h2 = h2.reshape(L2, Bt, C2)[0:2 * P2].reshape(P2, 2, Bt, C2)
    p2 = jnp.maximum(h2[:, 0], h2[:, 1])                              # (P2, Bt, C2)

    # ---- fc1 (flatten 64*P2 -> hidden), batch folded into M ----
    # Weights were pre-permuted to time-major (P2, C2, H) in the wrapper, so
    # this is sum_t p2[t] @ wfc1[t]; each dot has M = Bt rows.
    z = jnp.dot(p2[0], wfc1_ref[0], preferred_element_type=f32)
    for t in range(1, P2):        # static unroll, P2 is small
        z += jnp.dot(p2[t], wfc1_ref[t], preferred_element_type=f32)
    z = jnp.maximum(z + bfc1_ref[...], 0.0)                           # (Bt, H)
    # TODO(synk): nn.Dropout(p=0.5) is identity at inference; training-mode
    # stochastic masking is not implemented.

    # ---- fc2 ----
    out = jnp.dot(z, wfc2_ref[...], preferred_element_type=f32) + bfc2_ref[...]
    o_ref[...] = out.astype(o_ref.dtype)                              # (Bt, OUT)


def gait_phase_estimator(x, params, *, sequence_length, num_channels,
                         output_dim=1, batch_tile=8):
    B, L, C = x.shape
    assert L == sequence_length and C == num_channels
    assert batch_tile % 8 == 0 and B % batch_tile == 0, \
        "batch_tile must be a multiple of 8 and divide the batch"
    L1 = L - 2
    P1 = L1 // 2
    L2 = P1 - 2
    P2 = L2 // 2
    eps = 1e-5

    # ---- glue: reorganize PyTorch-shaped params into kernel-friendly layouts
    w1 = jnp.transpose(params["conv1_w"], (2, 1, 0))          # (3, C, 32)
    s1 = params["bn1_gamma"] / jnp.sqrt(params["bn1_var"] + eps)
    t1 = params["bn1_beta"] + (params["conv1_b"] - params["bn1_mean"]) * s1
    bn1 = jnp.stack([s1, t1], axis=0)                         # (2, 32)

    w2 = jnp.transpose(params["conv2_w"], (2, 1, 0))          # (3, 32, 64)
    s2 = params["bn2_gamma"] / jnp.sqrt(params["bn2_var"] + eps)
    t2 = params["bn2_beta"] + (params["conv2_b"] - params["bn2_mean"]) * s2
    bn2 = jnp.stack([s2, t2], axis=0)                         # (2, 64)

    H = params["fc1_w"].shape[0]
    C2 = params["fc1_w"].shape[1] // P2
    # PyTorch flattens (B, 64, P2) channel-major; kernel is time-major.
    wfc1 = jnp.transpose(params["fc1_w"].reshape(H, C2, P2), (2, 1, 0))  # (P2, 64, H)
    bfc1 = params["fc1_b"][None, :]                           # (1, H)
    wfc2 = jnp.transpose(params["fc2_w"], (1, 0))             # (H, OUT)
    bfc2 = params["fc2_b"][None, :]                           # (1, OUT)

    # Time-leading, batch-on-sublanes layout for the kernel input.
    xt = jnp.transpose(x, (1, 0, 2)).astype(jnp.float32)      # (L, B, C)

    nb = B // batch_tile
    kernel = functools.partial(_gait_kernel, L, batch_tile)

    def const_spec(a):
        nd = a.ndim
        return pl.BlockSpec(a.shape, lambda i, _nd=nd: (0,) * _nd)

    out = pl.pallas_call(
        kernel,
        out_shape=jax.ShapeDtypeStruct((B, output_dim), jnp.float32),
        grid_spec=pltpu.PrefetchScalarGridSpec(
            num_scalar_prefetch=0,
            grid=(nb,),
            in_specs=[
                pl.BlockSpec((L, batch_tile, C), lambda i: (0, i, 0)),
                const_spec(w1), const_spec(bn1),
                const_spec(w2), const_spec(bn2),
                const_spec(wfc1), const_spec(bfc1),
                const_spec(wfc2), const_spec(bfc2),
            ],
            out_specs=pl.BlockSpec((batch_tile, output_dim), lambda i: (i, 0)),
        ),
        compiler_params=pltpu.CompilerParams(
            dimension_semantics=("parallel",)),
    )(xt, w1, bn1, w2, bn2, wfc1, bfc1, wfc2, bfc2)
    return out


def reference(x, params):
    """Plain-JAX mirror of the PyTorch forward (inference mode)."""
    eps = 1e-5
    xc = jnp.transpose(x, (0, 2, 1))                          # (B, C, L), NCW

    def conv1d(h, w, b):
        out = lax.conv_general_dilated(
            h, w, window_strides=(1,), padding="VALID",
            dimension_numbers=("NCH", "OIH", "NCH"))
        return out + b[None, :, None]

    def bn(h, g, bta, m, v):
        return ((h - m[None, :, None]) / jnp.sqrt(v[None, :, None] + eps)
                * g[None, :, None] + bta[None, :, None])

    def pool(h):
        Bn, Cc, Ll = h.shape
        P = Ll // 2
        return h[:, :, :2 * P].reshape(Bn, Cc, P, 2).max(axis=-1)

    h = pool(jax.nn.relu(bn(conv1d(xc, params["conv1_w"], params["conv1_b"]),
                            params["bn1_gamma"], params["bn1_beta"],
                            params["bn1_mean"], params["bn1_var"])))
    h = pool(jax.nn.relu(bn(conv1d(h, params["conv2_w"], params["conv2_b"]),
                            params["bn2_gamma"], params["bn2_beta"],
                            params["bn2_mean"], params["bn2_var"])))
    flat = h.reshape(h.shape[0], -1)                          # channel-major flatten
    z = jax.nn.relu(flat @ params["fc1_w"].T + params["fc1_b"])
    return z @ params["fc2_w"].T + params["fc2_b"]


if __name__ == "__main__":
    B, L, C, OUT = 16, 32, 12, 1
    P2 = ((L - 2) // 2 - 2) // 2
    flat_size = 64 * P2

    keys = jax.random.split(jax.random.PRNGKey(0), 16)
    params = dict(
        conv1_w=0.1 * jax.random.normal(keys[0], (32, C, 3), jnp.float32),
        conv1_b=0.1 * jax.random.normal(keys[1], (32,), jnp.float32),
        bn1_gamma=1.0 + 0.1 * jax.random.normal(keys[2], (32,), jnp.float32),
        bn1_beta=0.1 * jax.random.normal(keys[3], (32,), jnp.float32),
        bn1_mean=0.1 * jax.random.normal(keys[4], (32,), jnp.float32),
        bn1_var=1.0 + 0.5 * jax.random.uniform(keys[5], (32,), jnp.float32),
        conv2_w=0.1 * jax.random.normal(keys[6], (64, 32, 3), jnp.float32),
        conv2_b=0.1 * jax.random.normal(keys[7], (64,), jnp.float32),
        bn2_gamma=1.0 + 0.1 * jax.random.normal(keys[8], (64,), jnp.float32),
        bn2_beta=0.1 * jax.random.normal(keys[9], (64,), jnp.float32),
        bn2_mean=0.1 * jax.random.normal(keys[10], (64,), jnp.float32),
        bn2_var=1.0 + 0.5 * jax.random.uniform(keys[11], (64,), jnp.float32),
        fc1_w=0.05 * jax.random.normal(keys[12], (100, flat_size), jnp.float32),
        fc1_b=0.1 * jax.random.normal(keys[13], (100,), jnp.float32),
        fc2_w=0.1 * jax.random.normal(keys[14], (OUT, 100), jnp.float32),
        fc2_b=0.1 * jax.random.normal(keys[15], (OUT,), jnp.float32),
    )
    x = jax.random.normal(jax.random.PRNGKey(1), (B, L, C), jnp.float32)

    out = gait_phase_estimator(x, params, sequence_length=L,
                               num_channels=C, output_dim=OUT, batch_tile=8)
    out = jax.block_until_ready(out)
    ref = reference(x, params)

    assert out.shape == (B, OUT)
    if not np.allclose(np.asarray(out), np.asarray(ref), rtol=2e-2, atol=2e-2):
        raise AssertionError(
            f"mismatch: kernel={np.asarray(out).ravel()} ref={np.asarray(ref).ravel()}")
    print("KERNEL_OK")
</pallas_src>

<mosaic_0001>
module attributes {stable_mosaic.version = 11 : i64} {
  func.func @_gait_kernel(%arg0: i32, %arg1: memref<32x8x12xf32, #tpu.memory_space<vmem>>, %arg2: memref<3x12x32xf32, #tpu.memory_space<vmem>>, %arg3: memref<2x32xf32, #tpu.memory_space<vmem>>, %arg4: memref<3x32x64xf32, #tpu.memory_space<vmem>>, %arg5: memref<2x64xf32, #tpu.memory_space<vmem>>, %arg6: memref<6x64x100xf32, #tpu.memory_space<vmem>>, %arg7: memref<1x100xf32, #tpu.memory_space<vmem>>, %arg8: memref<100x1xf32, #tpu.memory_space<vmem>>, %arg9: memref<1x1xf32, #tpu.memory_space<vmem>>, %arg10: memref<8x1xf32, #tpu.memory_space<vmem>>) attributes {dimension_semantics = [#tpu.dimension_semantics<parallel>], iteration_bounds = array<i64: 2>, scalar_prefetch = 0 : i64, scratch_operands = 0 : i64, tpu.core_type = #tpu.core_type<tc>, window_params = [{transform_indices = @transform_0, window_bounds = array<i64: 32, 8, 12>}, {pipeline_mode = #tpu.pipeline_mode<synchronous>, transform_indices = @transform_1, window_bounds = array<i64: 3, 12, 32>}, {pipeline_mode = #tpu.pipeline_mode<synchronous>, transform_indices = @transform_2, window_bounds = array<i64: 2, 32>}, {pipeline_mode = #tpu.pipeline_mode<synchronous>, transform_indices = @transform_3, window_bounds = array<i64: 3, 32, 64>}, {pipeline_mode = #tpu.pipeline_mode<synchronous>, transform_indices = @transform_4, window_bounds = array<i64: 2, 64>}, {pipeline_mode = #tpu.pipeline_mode<synchronous>, transform_indices = @transform_5, window_bounds = array<i64: 6, 64, 100>}, {pipeline_mode = #tpu.pipeline_mode<synchronous>, transform_indices = @transform_6, window_bounds = array<i64: 1, 100>}, {pipeline_mode = #tpu.pipeline_mode<synchronous>, transform_indices = @transform_7, window_bounds = array<i64: 100, 1>}, {pipeline_mode = #tpu.pipeline_mode<synchronous>, transform_indices = @transform_8, window_bounds = array<i64: 1, 1>}, {transform_indices = @transform_9, window_bounds = array<i64: 8, 1>}]} {
    %c0 = arith.constant 0 : index
    %c0_0 = arith.constant 0 : index
    %c0_1 = arith.constant 0 : index
    %0 = vector.load %arg1[%c0, %c0_0, %c0_1] : memref<32x8x12xf32, #tpu.memory_space<vmem>>, vector<32x8x12xf32>
    %1 = vector.extract_strided_slice %0 {offsets = [0, 0, 0], sizes = [30, 8, 12], strides = [1, 1, 1]} : vector<32x8x12xf32> to vector<30x8x12xf32>
    %c0_2 = arith.constant 0 : index
    %c0_3 = arith.constant 0 : index
    %c0_4 = arith.constant 0 : index
    %2 = vector.load %arg2[%c0_2, %c0_3, %c0_4] : memref<3x12x32xf32, #tpu.memory_space<vmem>>, vector<1x12x32xf32>
    %3 = vector.shape_cast %2 : vector<1x12x32xf32> to vector<12x32xf32>
    %4 = vector.shape_cast %1 : vector<30x8x12xf32> to vector<240x12xf32>
    %cst = arith.constant dense<0.000000e+00> : vector<240x32xf32>
    %5 = tpu.matmul %4, %3, %cst {dimension_numbers = #tpu.dot_dimension_numbers<[1], [0], [0], [1], [0, 0, 1, 1], [], []>} : vector<240x12xf32>, vector<12x32xf32>, vector<240x32xf32> -> vector<240x32xf32>
    %6 = vector.extract_strided_slice %0 {offsets = [1, 0, 0], sizes = [30, 8, 12], strides = [1, 1, 1]} : vector<32x8x12xf32> to vector<30x8x12xf32>
    %c1 = arith.constant 1 : index
    %c0_5 = arith.constant 0 : index
    %c0_6 = arith.constant 0 : index
    %7 = vector.load %arg2[%c1, %c0_5, %c0_6] : memref<3x12x32xf32, #tpu.memory_space<vmem>>, vector<1x12x32xf32>
    %8 = vector.shape_cast %7 : vector<1x12x32xf32> to vector<12x32xf32>
    %9 = vector.shape_cast %6 : vector<30x8x12xf32> to vector<240x12xf32>
    %cst_7 = arith.constant dense<0.000000e+00> : vector<240x32xf32>
    %10 = tpu.matmul %9, %8, %cst_7 {dimension_numbers = #tpu.dot_dimension_numbers<[1], [0], [0], [1], [0, 0, 1, 1], [], []>} : vector<240x12xf32>, vector<12x32xf32>, vector<240x32xf32> -> vector<240x32xf32>
    %11 = arith.addf %5, %10 : vector<240x32xf32>
    %12 = vector.extract_strided_slice %0 {offsets = [2, 0, 0], sizes = [30, 8, 12], strides = [1, 1, 1]} : vector<32x8x12xf32> to vector<30x8x12xf32>
    %c2 = arith.constant 2 : index
    %c0_8 = arith.constant 0 : index
    %c0_9 = arith.constant 0 : index
    %13 = vector.load %arg2[%c2, %c0_8, %c0_9] : memref<3x12x32xf32, #tpu.memory_space<vmem>>, vector<1x12x32xf32>
    %14 = vector.shape_cast %13 : vector<1x12x32xf32> to vector<12x32xf32>
    %15 = vector.shape_cast %12 : vector<30x8x12xf32> to vector<240x12xf32>
    %cst_10 = arith.constant dense<0.000000e+00> : vector<240x32xf32>
    %16 = tpu.matmul %15, %14, %cst_10 {dimension_numbers = #tpu.dot_dimension_numbers<[1], [0], [0], [1], [0, 0, 1, 1], [], []>} : vector<240x12xf32>, vector<12x32xf32>, vector<240x32xf32> -> vector<240x32xf32>
    %17 = arith.addf %11, %16 : vector<240x32xf32>
    %c0_11 = arith.constant 0 : index
    %c0_12 = arith.constant 0 : index
    %18 = vector.load %arg3[%c0_11, %c0_12] : memref<2x32xf32, #tpu.memory_space<vmem>>, vector<1x32xf32>
    %19 = vector.broadcast %18 : vector<1x32xf32> to vector<240x32xf32>
    %20 = arith.mulf %17, %19 : vector<240x32xf32>
    %c1_13 = arith.constant 1 : index
    %c0_14 = arith.constant 0 : index
    %21 = vector.load %arg3[%c1_13, %c0_14] : memref<2x32xf32, #tpu.memory_space<vmem>>, vector<1x32xf32>
    %22 = vector.broadcast %21 : vector<1x32xf32> to vector<240x32xf32>
    %23 = arith.addf %20, %22 : vector<240x32xf32>
    %cst_15 = arith.constant 0.000000e+00 : f32
    %24 = vector.broadcast %cst_15 : f32 to vector<240x32xf32>
    %25 = arith.maximumf %23, %24 : vector<240x32xf32>
    %26 = vector.shape_cast %25 : vector<240x32xf32> to vector<30x8x32xf32>
    %27 = vector.shape_cast %26 : vector<30x8x32xf32> to vector<15x2x8x32xf32>
    %28 = vector.extract_strided_slice %27 {offsets = [0, 0, 0, 0], sizes = [15, 1, 8, 32], strides = [1, 1, 1, 1]} : vector<15x2x8x32xf32> to vector<15x1x8x32xf32>
    %29 = vector.shape_cast %28 : vector<15x1x8x32xf32> to vector<15x8x32xf32>
    %30 = vector.extract_strided_slice %27 {offsets = [0, 1, 0, 0], sizes = [15, 1, 8, 32], strides = [1, 1, 1, 1]} : vector<15x2x8x32xf32> to vector<15x1x8x32xf32>
    %31 = vector.shape_cast %30 : vector<15x1x8x32xf32> to vector<15x8x32xf32>
    %32 = arith.maximumf %29, %31 : vector<15x8x32xf32>
    %33 = vector.extract_strided_slice %32 {offsets = [0, 0, 0], sizes = [13, 8, 32], strides = [1, 1, 1]} : vector<15x8x32xf32> to vector<13x8x32xf32>
    %c0_16 = arith.constant 0 : index
    %c0_17 = arith.constant 0 : index
    %c0_18 = arith.constant 0 : index
    %34 = vector.load %arg4[%c0_16, %c0_17, %c0_18] : memref<3x32x64xf32, #tpu.memory_space<vmem>>, vector<1x32x64xf32>
    %35 = vector.shape_cast %34 : vector<1x32x64xf32> to vector<32x64xf32>
    %36 = vector.shape_cast %33 : vector<13x8x32xf32> to vector<104x32xf32>
    %cst_19 = arith.constant dense<0.000000e+00> : vector<104x64xf32>
    %37 = tpu.matmul %36, %35, %cst_19 {dimension_numbers = #tpu.dot_dimension_numbers<[1], [0], [0], [1], [0, 0, 1, 1], [], []>} : vector<104x32xf32>, vector<32x64xf32>, vector<104x64xf32> -> vector<104x64xf32>
    %38 = vector.extract_strided_slice %32 {offsets = [1, 0, 0], sizes = [13, 8, 32], strides = [1, 1, 1]} : vector<15x8x32xf32> to vector<13x8x32xf32>
    %c1_20 = arith.constant 1 : index
    %c0_21 = arith.constant 0 : index
    %c0_22 = arith.constant 0 : index
    %39 = vector.load %arg4[%c1_20, %c0_21, %c0_22] : memref<3x32x64xf32, #tpu.memory_space<vmem>>, vector<1x32x64xf32>
    %40 = vector.shape_cast %39 : vector<1x32x64xf32> to vector<32x64xf32>
    %41 = vector.shape_cast %38 : vector<13x8x32xf32> to vector<104x32xf32>
    %cst_23 = arith.constant dense<0.000000e+00> : vector<104x64xf32>
    %42 = tpu.matmul %41, %40, %cst_23 {dimension_numbers = #tpu.dot_dimension_numbers<[1], [0], [0], [1], [0, 0, 1, 1], [], []>} : vector<104x32xf32>, vector<32x64xf32>, vector<104x64xf32> -> vector<104x64xf32>
    %43 = arith.addf %37, %42 : vector<104x64xf32>
    %44 = vector.extract_strided_slice %32 {offsets = [2, 0, 0], sizes = [13, 8, 32], strides = [1, 1, 1]} : vector<15x8x32xf32> to vector<13x8x32xf32>
    %c2_24 = arith.constant 2 : index
    %c0_25 = arith.constant 0 : index
    %c0_26 = arith.constant 0 : index
    %45 = vector.load %arg4[%c2_24, %c0_25, %c0_26] : memref<3x32x64xf32, #tpu.memory_space<vmem>>, vector<1x32x64xf32>
    %46 = vector.shape_cast %45 : vector<1x32x64xf32> to vector<32x64xf32>
    %47 = vector.shape_cast %44 : vector<13x8x32xf32> to vector<104x32xf32>
    %cst_27 = arith.constant dense<0.000000e+00> : vector<104x64xf32>
    %48 = tpu.matmul %47, %46, %cst_27 {dimension_numbers = #tpu.dot_dimension_numbers<[1], [0], [0], [1], [0, 0, 1, 1], [], []>} : vector<104x32xf32>, vector<32x64xf32>, vector<104x64xf32> -> vector<104x64xf32>
    %49 = arith.addf %43, %48 : vector<104x64xf32>
    %c0_28 = arith.constant 0 : index
    %c0_29 = arith.constant 0 : index
    %50 = vector.load %arg5[%c0_28, %c0_29] : memref<2x64xf32, #tpu.memory_space<vmem>>, vector<1x64xf32>
    %51 = vector.broadcast %50 : vector<1x64xf32> to vector<104x64xf32>
    %52 = arith.mulf %49, %51 : vector<104x64xf32>
    %c1_30 = arith.constant 1 : index
    %c0_31 = arith.constant 0 : index
    %53 = vector.load %arg5[%c1_30, %c0_31] : memref<2x64xf32, #tpu.memory_space<vmem>>, vector<1x64xf32>
    %54 = vector.broadcast %53 : vector<1x64xf32> to vector<104x64xf32>
    %55 = arith.addf %52, %54 : vector<104x64xf32>
    %cst_32 = arith.constant 0.000000e+00 : f32
    %56 = vector.broadcast %cst_32 : f32 to vector<104x64xf32>
    %57 = arith.maximumf %55, %56 : vector<104x64xf32>
    %58 = vector.shape_cast %57 : vector<104x64xf32> to vector<13x8x64xf32>
    %59 = vector.extract_strided_slice %58 {offsets = [0, 0, 0], sizes = [12, 8, 64], strides = [1, 1, 1]} : vector<13x8x64xf32> to vector<12x8x64xf32>
    %60 = vector.shape_cast %59 : vector<12x8x64xf32> to vector<6x2x8x64xf32>
    %61 = vector.extract_strided_slice %60 {offsets = [0, 0, 0, 0], sizes = [6, 1, 8, 64], strides = [1, 1, 1, 1]} : vector<6x2x8x64xf32> to vector<6x1x8x64xf32>
    %62 = vector.shape_cast %61 : vector<6x1x8x64xf32> to vector<6x8x64xf32>
    %63 = vector.extract_strided_slice %60 {offsets = [0, 1, 0, 0], sizes = [6, 1, 8, 64], strides = [1, 1, 1, 1]} : vector<6x2x8x64xf32> to vector<6x1x8x64xf32>
    %64 = vector.shape_cast %63 : vector<6x1x8x64xf32> to vector<6x8x64xf32>
    %65 = arith.maximumf %62, %64 : vector<6x8x64xf32>
    %66 = vector.extract_strided_slice %65 {offsets = [0, 0, 0], sizes = [1, 8, 64], strides = [1, 1, 1]} : vector<6x8x64xf32> to vector<1x8x64xf32>
    %67 = vector.shape_cast %66 : vector<1x8x64xf32> to vector<8x64xf32>
    %c0_33 = arith.constant 0 : index
    %c0_34 = arith.constant 0 : index
    %c0_35 = arith.constant 0 : index
    %68 = vector.load %arg6[%c0_33, %c0_34, %c0_35] : memref<6x64x100xf32, #tpu.memory_space<vmem>>, vector<1x64x100xf32>
    %69 = vector.shape_cast %68 : vector<1x64x100xf32> to vector<64x100xf32>
    %cst_36 = arith.constant dense<0.000000e+00> : vector<8x100xf32>
    %70 = tpu.matmul %67, %69, %cst_36 {dimension_numbers = #tpu.dot_dimension_numbers<[1], [0], [0], [1], [0, 0, 1, 1], [], []>} : vector<8x64xf32>, vector<64x100xf32>, vector<8x100xf32> -> vector<8x100xf32>
    %71 = vector.extract_strided_slice %65 {offsets = [1, 0, 0], sizes = [1, 8, 64], strides = [1, 1, 1]} : vector<6x8x64xf32> to vector<1x8x64xf32>
    %72 = vector.shape_cast %71 : vector<1x8x64xf32> to vector<8x64xf32>
    %c1_37 = arith.constant 1 : index
    %c0_38 = arith.constant 0 : index
    %c0_39 = arith.constant 0 : index
    %73 = vector.load %arg6[%c1_37, %c0_38, %c0_39] : memref<6x64x100xf32, #tpu.memory_space<vmem>>, vector<1x64x100xf32>
    %74 = vector.shape_cast %73 : vector<1x64x100xf32> to vector<64x100xf32>
    %cst_40 = arith.constant dense<0.000000e+00> : vector<8x100xf32>
    %75 = tpu.matmul %72, %74, %cst_40 {dimension_numbers = #tpu.dot_dimension_numbers<[1], [0], [0], [1], [0, 0, 1, 1], [], []>} : vector<8x64xf32>, vector<64x100xf32>, vector<8x100xf32> -> vector<8x100xf32>
    %76 = arith.addf %70, %75 : vector<8x100xf32>
    %77 = vector.extract_strided_slice %65 {offsets = [2, 0, 0], sizes = [1, 8, 64], strides = [1, 1, 1]} : vector<6x8x64xf32> to vector<1x8x64xf32>
    %78 = vector.shape_cast %77 : vector<1x8x64xf32> to vector<8x64xf32>
    %c2_41 = arith.constant 2 : index
    %c0_42 = arith.constant 0 : index
    %c0_43 = arith.constant 0 : index
    %79 = vector.load %arg6[%c2_41, %c0_42, %c0_43] : memref<6x64x100xf32, #tpu.memory_space<vmem>>, vector<1x64x100xf32>
    %80 = vector.shape_cast %79 : vector<1x64x100xf32> to vector<64x100xf32>
    %cst_44 = arith.constant dense<0.000000e+00> : vector<8x100xf32>
    %81 = tpu.matmul %78, %80, %cst_44 {dimension_numbers = #tpu.dot_dimension_numbers<[1], [0], [0], [1], [0, 0, 1, 1], [], []>} : vector<8x64xf32>, vector<64x100xf32>, vector<8x100xf32> -> vector<8x100xf32>
    %82 = arith.addf %76, %81 : vector<8x100xf32>
    %83 = vector.extract_strided_slice %65 {offsets = [3, 0, 0], sizes = [1, 8, 64], strides = [1, 1, 1]} : vector<6x8x64xf32> to vector<1x8x64xf32>
    %84 = vector.shape_cast %83 : vector<1x8x64xf32> to vector<8x64xf32>
    %c3 = arith.constant 3 : index
    %c0_45 = arith.constant 0 : index
    %c0_46 = arith.constant 0 : index
    %85 = vector.load %arg6[%c3, %c0_45, %c0_46] : memref<6x64x100xf32, #tpu.memory_space<vmem>>, vector<1x64x100xf32>
    %86 = vector.shape_cast %85 : vector<1x64x100xf32> to vector<64x100xf32>
    %cst_47 = arith.constant dense<0.000000e+00> : vector<8x100xf32>
    %87 = tpu.matmul %84, %86, %cst_47 {dimension_numbers = #tpu.dot_dimension_numbers<[1], [0], [0], [1], [0, 0, 1, 1], [], []>} : vector<8x64xf32>, vector<64x100xf32>, vector<8x100xf32> -> vector<8x100xf32>
    %88 = arith.addf %82, %87 : vector<8x100xf32>
    %89 = vector.extract_strided_slice %65 {offsets = [4, 0, 0], sizes = [1, 8, 64], strides = [1, 1, 1]} : vector<6x8x64xf32> to vector<1x8x64xf32>
    %90 = vector.shape_cast %89 : vector<1x8x64xf32> to vector<8x64xf32>
    %c4 = arith.constant 4 : index
    %c0_48 = arith.constant 0 : index
    %c0_49 = arith.constant 0 : index
    %91 = vector.load %arg6[%c4, %c0_48, %c0_49] : memref<6x64x100xf32, #tpu.memory_space<vmem>>, vector<1x64x100xf32>
    %92 = vector.shape_cast %91 : vector<1x64x100xf32> to vector<64x100xf32>
    %cst_50 = arith.constant dense<0.000000e+00> : vector<8x100xf32>
    %93 = tpu.matmul %90, %92, %cst_50 {dimension_numbers = #tpu.dot_dimension_numbers<[1], [0], [0], [1], [0, 0, 1, 1], [], []>} : vector<8x64xf32>, vector<64x100xf32>, vector<8x100xf32> -> vector<8x100xf32>
    %94 = arith.addf %88, %93 : vector<8x100xf32>
    %95 = vector.extract_strided_slice %65 {offsets = [5, 0, 0], sizes = [1, 8, 64], strides = [1, 1, 1]} : vector<6x8x64xf32> to vector<1x8x64xf32>
    %96 = vector.shape_cast %95 : vector<1x8x64xf32> to vector<8x64xf32>
    %c5 = arith.constant 5 : index
    %c0_51 = arith.constant 0 : index
    %c0_52 = arith.constant 0 : index
    %97 = vector.load %arg6[%c5, %c0_51, %c0_52] : memref<6x64x100xf32, #tpu.memory_space<vmem>>, vector<1x64x100xf32>
    %98 = vector.shape_cast %97 : vector<1x64x100xf32> to vector<64x100xf32>
    %cst_53 = arith.constant dense<0.000000e+00> : vector<8x100xf32>
    %99 = tpu.matmul %96, %98, %cst_53 {dimension_numbers = #tpu.dot_dimension_numbers<[1], [0], [0], [1], [0, 0, 1, 1], [], []>} : vector<8x64xf32>, vector<64x100xf32>, vector<8x100xf32> -> vector<8x100xf32>
    %100 = arith.addf %94, %99 : vector<8x100xf32>
    %c0_54 = arith.constant 0 : index
    %c0_55 = arith.constant 0 : index
    %101 = vector.load %arg7[%c0_54, %c0_55] : memref<1x100xf32, #tpu.memory_space<vmem>>, vector<1x100xf32>
    %102 = vector.broadcast %101 : vector<1x100xf32> to vector<8x100xf32>
    %103 = arith.addf %100, %102 : vector<8x100xf32>
    %cst_56 = arith.constant 0.000000e+00 : f32
    %104 = vector.broadcast %cst_56 : f32 to vector<8x100xf32>
    %105 = arith.maximumf %103, %104 : vector<8x100xf32>
    %c0_57 = arith.constant 0 : index
    %c0_58 = arith.constant 0 : index
    %106 = vector.load %arg8[%c0_57, %c0_58] : memref<100x1xf32, #tpu.memory_space<vmem>>, vector<100x1xf32>
    %cst_59 = arith.constant dense<0.000000e+00> : vector<8x1xf32>
    %107 = tpu.matmul %105, %106, %cst_59 {dimension_numbers = #tpu.dot_dimension_numbers<[1], [0], [0], [1], [0, 0, 1, 1], [], []>} : vector<8x100xf32>, vector<100x1xf32>, vector<8x1xf32> -> vector<8x1xf32>
    %c0_60 = arith.constant 0 : index
    %c0_61 = arith.constant 0 : index
    %108 = vector.load %arg9[%c0_60, %c0_61] : memref<1x1xf32, #tpu.memory_space<vmem>>, vector<1x1xf32>
    %109 = vector.broadcast %108 : vector<1x1xf32> to vector<8x1xf32>
    %110 = arith.addf %107, %109 : vector<8x1xf32>
    %c0_62 = arith.constant 0 : index
    %c0_63 = arith.constant 0 : index
    %111 = vector.load %arg10[%c0_62, %c0_63] : memref<8x1xf32, #tpu.memory_space<vmem>>, vector<8x1xf32>
    tpu.vector_store %arg10[%c0_62, %c0_63], %110 {strides = array<i32>} : memref<8x1xf32, #tpu.memory_space<vmem>>, vector<8x1xf32>,
    return
  }
  func.func @transform_0(%arg0: i32) -> (i32, i32, i32) {
    %c0_i32 = arith.constant 0 : i32
    %c0_i32_0 = arith.constant 0 : i32
    %c0_i32_1 = arith.constant 0 : i32
    return %c0_i32, %arg0, %c0_i32_0 : i32, i32, i32
  }
  func.func @transform_1(%arg0: i32) -> (i32, i32, i32) {
    %c0_i32 = arith.constant 0 : i32
    %c0_i32_0 = arith.constant 0 : i32
    %c0_i32_1 = arith.constant 0 : i32
    %c0_i32_2 = arith.constant 0 : i32
    return %c0_i32, %c0_i32_0, %c0_i32_1 : i32, i32, i32
  }
  func.func @transform_2(%arg0: i32) -> (i32, i32) {
    %c0_i32 = arith.constant 0 : i32
    %c0_i32_0 = arith.constant 0 : i32
    %c0_i32_1 = arith.constant 0 : i32
    return %c0_i32, %c0_i32_0 : i32, i32
  }
  func.func @transform_3(%arg0: i32) -> (i32, i32, i32) {
    %c0_i32 = arith.constant 0 : i32
    %c0_i32_0 = arith.constant 0 : i32
    %c0_i32_1 = arith.constant 0 : i32
    %c0_i32_2 = arith.constant 0 : i32
    return %c0_i32, %c0_i32_0, %c0_i32_1 : i32, i32, i32
  }
  func.func @transform_4(%arg0: i32) -> (i32, i32) {
    %c0_i32 = arith.constant 0 : i32
    %c0_i32_0 = arith.constant 0 : i32
    %c0_i32_1 = arith.constant 0 : i32
    return %c0_i32, %c0_i32_0 : i32, i32
  }
  func.func @transform_5(%arg0: i32) -> (i32, i32, i32) {
    %c0_i32 = arith.constant 0 : i32
    %c0_i32_0 = arith.constant 0 : i32
    %c0_i32_1 = arith.constant 0 : i32
    %c0_i32_2 = arith.constant 0 : i32
    return %c0_i32, %c0_i32_0, %c0_i32_1 : i32, i32, i32
  }
  func.func @transform_6(%arg0: i32) -> (i32, i32) {
    %c0_i32 = arith.constant 0 : i32
    %c0_i32_0 = arith.constant 0 : i32
    %c0_i32_1 = arith.constant 0 : i32
    return %c0_i32, %c0_i32_0 : i32, i32
  }
  func.func @transform_7(%arg0: i32) -> (i32, i32) {
    %c0_i32 = arith.constant 0 : i32
    %c0_i32_0 = arith.constant 0 : i32
    %c0_i32_1 = arith.constant 0 : i32
    return %c0_i32, %c0_i32_0 : i32, i32
  }
  func.func @transform_8(%arg0: i32) -> (i32, i32) {
    %c0_i32 = arith.constant 0 : i32
    %c0_i32_0 = arith.constant 0 : i32
    %c0_i32_1 = arith.constant 0 : i32
    return %c0_i32, %c0_i32_0 : i32, i32
  }
  func.func @transform_9(%arg0: i32) -> (i32, i32) {
    %c0_i32 = arith.constant 0 : i32
    %c0_i32_0 = arith.constant 0 : i32
    return %arg0, %c0_i32 : i32, i32
  }
}

</mosaic_0001>

<llo_original>
// kernel: tpu_custom_call.1
$region0: #{tpu_custom_call.1}
  #allocation0 [shape = 'u32[]', space=smem, size = 0x4, offset = 0x4, fixed_abs, tag = 'smem constant byte address 0x4 - core index']
  #allocation1 [shape = 'u32[144,128]{1,0:T(1,128)}', space=vmem, size = 0x12000, scoped, tag = 'internal scratch']
  #allocation2 [shape = 'f32[1,1]{1,0:T(1,128)S(1)}', space=vmem, size = 0x200, scoped, tag = 'scoped memory for tpu_custom_call.1']
  %s0 = inlined_call_operand.vmem [shape: f32[32,16,12], index: 0, kind: input, shape index: {}]
  %s1 = inlined_call_operand.vmem [shape: f32[3,12,32], index: 1, kind: input, shape index: {}]
  %s2 = inlined_call_operand.vmem [shape: f32[2,32], index: 2, kind: input, shape index: {}]
  %s3 = inlined_call_operand.vmem [shape: f32[3,32,64], index: 3, kind: input, shape index: {}]
  %s4 = inlined_call_operand.vmem [shape: f32[2,64], index: 4, kind: input, shape index: {}]
  %s5 = inlined_call_operand.vmem [shape: f32[6,64,100], index: 5, kind: input, shape index: {}]
  %s6 = inlined_call_operand.vmem [shape: f32[1,100], index: 6, kind: input, shape index: {}]
  %s7 = inlined_call_operand.vmem [shape: f32[100,1], index: 7, kind: input, shape index: {}]
  %s8 = inlined_call_operand.<no memory space> [shape: f32[1,1], index: 8, kind: input, shape index: {}]
  %s9 = inlined_call_operand.vmem [shape: f32[16,1], index: 9, kind: output, shape index: {}]
  %s10 = sld [smem:[#allocation0]]
  $region107: #{tpu_custom_call.1} parent=0
    _
  %s12 = ssub.s32 1, %s10
  %s13 = scalar_select 0, %s12, %s10
  %v14 = vstv %s8
  %15 = vst [vmem:[#allocation2] sm:$0x1] %v14
  $region1: #{tpu_custom_call.1} parent=0
    #allocation3 [shape = 'u8[262144]{0}', space=vmem, size = 0x40000, scoped, tag = 'input window, operand 0']
    loop: start=0, step=1, limit=4
    $region2: #{tpu_custom_call.1} parent=1 // loop_pre_header
      _
    $region3: #{tpu_custom_call.1} parent=1 // loop_header
      %s17 = sphi 0, %s21
      %p18 = scmp.ge.s32.totalorder %s17, 4
      %s27 = sphi 0, %s29
      %s30 = sphi 0, %s27
      %s31 = sphi 0, %s30
      %s47 = sphi 0, %s31
      %s51 = sphi 0, %s51
      %s53 = sphi 0, %s51
      %s54 = sphi 0, %s53
      %s68 = sphi 0, %s54
      %s72 = sphi 0, %s72
      %s74 = sphi 0, %s72
      %s75 = sphi 0, %s74
      %s89 = sphi 0, %s75
      %s93 = sphi 0, %s93
      %s95 = sphi 0, %s93
      %s96 = sphi 0, %s95
      %s110 = sphi 0, %s96
      %s114 = sphi 0, %s114
      %s116 = sphi 0, %s114
      %s117 = sphi 0, %s116
      %s131 = sphi 0, %s117
      %s135 = sphi 0, %s135
      %s137 = sphi 0, %s135
      %s138 = sphi 0, %s137
      %s152 = sphi 0, %s138
      %s156 = sphi 0, %s156
      %s158 = sphi 0, %s156
      %s159 = sphi 0, %s158
      %s173 = sphi 0, %s159
      %s177 = sphi 0, %s177
      %s179 = sphi 0, %s177
      %s180 = sphi 0, %s179
      %s194 = sphi 0, %s180
      %s198 = sphi 0, %s198
      %s200 = sphi 0, %s198
      %s201 = sphi 0, %s200
      %s215 = sphi 0, %s201
      %s221 = sphi 0, %s223
      %s224 = sphi 0, %s221
      %s225 = sphi 0, %s224
      %s241 = sphi 0, %s225
    $region4: #{tpu_custom_call.1} parent=1 // loop_header_branch
      %20 = sbr.rel (%p18) target = $region8
    $region5: #{tpu_custom_call.1} parent=1 // loop_body
      %s22 = ssub.s32 %s17, 1
      %s23 = ssub.s32 %s17, 2
      %s24 = sadd.s32 %s17, 1
      %s25 = ssub.s32 %s17, %s24
      %p26 = scmp.eq.s32.totalorder %s25, 0
      %s28 = sadd.s32 %s27, 1
      %s29 = scalar_select %p26, %s27, %s28
      %p32 = pneg %p26
      %p33 = scmp.eq.s32.totalorder %s17, 1
      %p34 = por %p32, %p33
      %p35 = scmp.ne.s32.totalorder %s27, %s30
      %p36 = scmp.eq.s32.totalorder %s17, 0
      %p37 = por %p35, %p36
      %p38 = scmp.ne.s32.totalorder %s27, %s30
      %p39 = scmp.eq.s32.totalorder %s22, 1
      %p40 = por %p38, %p39
      %p41 = scmp.ne.s32.totalorder %s30, %s31
      %p42 = scmp.eq.s32.totalorder %s22, 0
      %p43 = por %p41, %p42
      %p44 = scmp.ne.s32.totalorder %s30, %s31
      %p45 = scmp.eq.s32.totalorder %s23, 1
      %p46 = por %p44, %p45
      %p48 = scmp.ne.s32.totalorder %s31, %s47
      %p49 = scmp.eq.s32.totalorder %s23, 0
      %p50 = por %p48, %p49
      %s52 = sadd.s32 %s51, 1
      %p55 = scmp.eq.s32.totalorder %s17, 1
      %p56 = scmp.ne.s32.totalorder %s51, %s53
      %p57 = scmp.eq.s32.totalorder %s17, 0
      %p58 = por %p56, %p57
      %p59 = scmp.ne.s32.totalorder %s51, %s53
      %p60 = scmp.eq.s32.totalorder %s22, 1
      %p61 = por %p59, %p60
      %p62 = scmp.ne.s32.totalorder %s53, %s54
      %p63 = scmp.eq.s32.totalorder %s22, 0
      %p64 = por %p62, %p63
      %p65 = scmp.ne.s32.totalorder %s53, %s54
      %p66 = scmp.eq.s32.totalorder %s23, 1
      %p67 = por %p65, %p66
      %p69 = scmp.ne.s32.totalorder %s54, %s68
      %p70 = scmp.eq.s32.totalorder %s23, 0
      %p71 = por %p69, %p70
      %s73 = sadd.s32 %s72, 1
      %p76 = scmp.eq.s32.totalorder %s17, 1
      %p77 = scmp.ne.s32.totalorder %s72, %s74
      %p78 = scmp.eq.s32.totalorder %s17, 0
      %p79 = por %p77, %p78
      %p80 = scmp.ne.s32.totalorder %s72, %s74
      %p81 = scmp.eq.s32.totalorder %s22, 1
      %p82 = por %p80, %p81
      %p83 = scmp.ne.s32.totalorder %s74, %s75
      %p84 = scmp.eq.s32.totalorder %s22, 0
      %p85 = por %p83, %p84
      %p86 = scmp.ne.s32.totalorder %s74, %s75
      %p87 = scmp.eq.s32.totalorder %s23, 1
      %p88 = por %p86, %p87
      %p90 = scmp.ne.s32.totalorder %s75, %s89
      %p91 = scmp.eq.s32.totalorder %s23, 0
      %p92 = por %p90, %p91
      %s94 = sadd.s32 %s93, 1
      %p97 = scmp.eq.s32.totalorder %s17, 1
      %p98 = scmp.ne.s32.totalorder %s93, %s95
      %p99 = scmp.eq.s32.totalorder %s17, 0
      %p100 = por %p98, %p99
      %p101 = scmp.ne.s32.totalorder %s93, %s95
      %p102 = scmp.eq.s32.totalorder %s22, 1
      %p103 = por %p101, %p102
      %p104 = scmp.ne.s32.totalorder %s95, %s96
      %p105 = scmp.eq.s32.totalorder %s22, 0
      %p106 = por %p104, %p105
      %p107 = scmp.ne.s32.totalorder %s95, %s96
      %p108 = scmp.eq.s32.totalorder %s23, 1
      %p109 = por %p107, %p108
      %p111 = scmp.ne.s32.totalorder %s96, %s110
      %p112 = scmp.eq.s32.totalorder %s23, 0
      %p113 = por %p111, %p112
      %s115 = sadd.s32 %s114, 1
      %p118 = scmp.eq.s32.totalorder %s17, 1
      %p119 = scmp.ne.s32.totalorder %s114, %s116
      %p120 = scmp.eq.s32.totalorder %s17, 0
      %p121 = por %p119, %p120
      %p122 = scmp.ne.s32.totalorder %s114, %s116
      %p123 = scmp.eq.s32.totalorder %s22, 1
      %p124 = por %p122, %p123
      %p125 = scmp.ne.s32.totalorder %s116, %s117
      %p126 = scmp.eq.s32.totalorder %s22, 0
      %p127 = por %p125, %p126
      %p128 = scmp.ne.s32.totalorder %s116, %s117
      %p129 = scmp.eq.s32.totalorder %s23, 1
      %p130 = por %p128, %p129
      %p132 = scmp.ne.s32.totalorder %s117, %s131
      %p133 = scmp.eq.s32.totalorder %s23, 0
      %p134 = por %p132, %p133
      %s136 = sadd.s32 %s135, 1
      %p139 = scmp.eq.s32.totalorder %s17, 1
      %p140 = scmp.ne.s32.totalorder %s135, %s137
      %p141 = scmp.eq.s32.totalorder %s17, 0
      %p142 = por %p140, %p141
      %p143 = scmp.ne.s32.totalorder %s135, %s137
      %p144 = scmp.eq.s32.totalorder %s22, 1
      %p145 = por %p143, %p144
      %p146 = scmp.ne.s32.totalorder %s137, %s138
      %p147 = scmp.eq.s32.totalorder %s22, 0
      %p148 = por %p146, %p147
      %p149 = scmp.ne.s32.totalorder %s137, %s138
      %p150 = scmp.eq.s32.totalorder %s23, 1
      %p151 = por %p149, %p150
      %p153 = scmp.ne.s32.totalorder %s138, %s152
      %p154 = scmp.eq.s32.totalorder %s23, 0
      %p155 = por %p153, %p154
      %s157 = sadd.s32 %s156, 1
      %p160 = scmp.eq.s32.totalorder %s17, 1
      %p161 = scmp.ne.s32.totalorder %s156, %s158
      %p162 = scmp.eq.s32.totalorder %s17, 0
      %p163 = por %p161, %p162
      %p164 = scmp.ne.s32.totalorder %s156, %s158
      %p165 = scmp.eq.s32.totalorder %s22, 1
      %p166 = por %p164, %p165
      %p167 = scmp.ne.s32.totalorder %s158, %s159
      %p168 = scmp.eq.s32.totalorder %s22, 0
      %p169 = por %p167, %p168
      %p170 = scmp.ne.s32.totalorder %s158, %s159
      %p171 = scmp.eq.s32.totalorder %s23, 1
      %p172 = por %p170, %p171
      %p174 = scmp.ne.s32.totalorder %s159, %s173
      %p175 = scmp.eq.s32.totalorder %s23, 0
      %p176 = por %p174, %p175
      %s178 = sadd.s32 %s177, 1
      %p181 = scmp.eq.s32.totalorder %s17, 1
      %p182 = scmp.ne.s32.totalorder %s177, %s179
      %p183 = scmp.eq.s32.totalorder %s17, 0
      %p184 = por %p182, %p183
      %p185 = scmp.ne.s32.totalorder %s177, %s179
      %p186 = scmp.eq.s32.totalorder %s22, 1
      %p187 = por %p185, %p186
      %p188 = scmp.ne.s32.totalorder %s179, %s180
      %p189 = scmp.eq.s32.totalorder %s22, 0
      %p190 = por %p188, %p189
      %p191 = scmp.ne.s32.totalorder %s179, %s180
      %p192 = scmp.eq.s32.totalorder %s23, 1
      %p193 = por %p191, %p192
      %p195 = scmp.ne.s32.totalorder %s180, %s194
      %p196 = scmp.eq.s32.totalorder %s23, 0
      %p197 = por %p195, %p196
      %s199 = sadd.s32 %s198, 1
      %p202 = scmp.eq.s32.totalorder %s17, 1
      %p203 = scmp.ne.s32.totalorder %s198, %s200
      %p204 = scmp.eq.s32.totalorder %s17, 0
      %p205 = por %p203, %p204
      %p206 = scmp.ne.s32.totalorder %s198, %s200
      %p207 = scmp.eq.s32.totalorder %s22, 1
      %p208 = por %p206, %p207
      %p209 = scmp.ne.s32.totalorder %s200, %s201
      %p210 = scmp.eq.s32.totalorder %s22, 0
      %p211 = por %p209, %p210
      %p212 = scmp.ne.s32.totalorder %s200, %s201
      %p213 = scmp.eq.s32.totalorder %s23, 1
      %p214 = por %p212, %p213
      %p216 = scmp.ne.s32.totalorder %s201, %s215
      %p217 = scmp.eq.s32.totalorder %s23, 0
      %p218 = por %p216, %p217
      %s219 = ssub.s32 %s17, %s24
      %p220 = scmp.eq.s32.totalorder %s219, 0
      %s222 = sadd.s32 %s221, 1
      %s223 = scalar_select %p220, %s221, %s222
      %p226 = pneg %p220
      %p227 = scmp.eq.s32.totalorder %s17, 1
      %p228 = por %p226, %p227
      %p229 = scmp.ne.s32.totalorder %s221, %s224
      %p230 = scmp.eq.s32.totalorder %s17, 0
      %p231 = por %p229, %p230
      %p232 = scmp.ne.s32.totalorder %s221, %s224
      %p233 = scmp.eq.s32.totalorder %s22, 1
      %p234 = por %p232, %p233
      %p235 = scmp.ne.s32.totalorder %s224, %s225
      %p236 = scmp.eq.s32.totalorder %s22, 0
      %p237 = por %p235, %p236
      %p238 = scmp.ne.s32.totalorder %s224, %s225
      %p239 = scmp.eq.s32.totalorder %s23, 1
      %p240 = por %p238, %p239
      %p242 = scmp.ne.s32.totalorder %s225, %s241
      %p243 = scmp.eq.s32.totalorder %s23, 0
      %p244 = por %p242, %p243
      %p245 = scmp.le.s32.totalorder 1, %s17
      %p246 = scmp.lt.s32.totalorder %s17, 3
      %p247 = pnand %p245, %p246
      %p248 = pneg %p247
      // Predicated region
      $region9: #{tpu_custom_call.1} parent=5 // pred_check
        _
      $region10: #{tpu_custom_call.1} parent=5 // pred_check_branch
        %250 = sbr.rel (%p247) target = $region12
      $region11: #{tpu_custom_call.1} parent=5 // pred_region
        %s251 = ssub.s32 %s17, 1
        // Predicated region
        $region13: #{tpu_custom_call.1} parent=11 // pred_check
          %p252 = pneg %p64
        $region14: #{tpu_custom_call.1} parent=11 // pred_check_branch
          %254 = sbr.rel (%p252) target = $region16
        $region15: #{tpu_custom_call.1} parent=11 // pred_region
          _
        $region16: #{tpu_custom_call.1} parent=11 // pred_fallthru
          _
        // Predicated region
        $region17: #{tpu_custom_call.1} parent=11 // pred_check
          %p255 = pneg %p85
        $region18: #{tpu_custom_call.1} parent=11 // pred_check_branch
          %257 = sbr.rel (%p255) target = $region20
        $region19: #{tpu_custom_call.1} parent=11 // pred_region
          _
        $region20: #{tpu_custom_call.1} parent=11 // pred_fallthru
          _
        // Predicated region
        $region21: #{tpu_custom_call.1} parent=11 // pred_check
          %p258 = pneg %p106
        $region22: #{tpu_custom_call.1} parent=11 // pred_check_branch
          %260 = sbr.rel (%p258) target = $region24
        $region23: #{tpu_custom_call.1} parent=11 // pred_region
          _
        $region24: #{tpu_custom_call.1} parent=11 // pred_fallthru
          _
        // Predicated region
        $region25: #{tpu_custom_call.1} parent=11 // pred_check
          %p261 = pneg %p127
        $region26: #{tpu_custom_call.1} parent=11 // pred_check_branch
          %263 = sbr.rel (%p261) target = $region28
        $region27: #{tpu_custom_call.1} parent=11 // pred_region
          _
        $region28: #{tpu_custom_call.1} parent=11 // pred_fallthru
          _
        // Predicated region
        $region29: #{tpu_custom_call.1} parent=11 // pred_check
          %p264 = pneg %p148
        $region30: #{tpu_custom_call.1} parent=11 // pred_check_branch
          %266 = sbr.rel (%p264) target = $region32
        $region31: #{tpu_custom_call.1} parent=11 // pred_region
          _
        $region32: #{tpu_custom_call.1} parent=11 // pred_fallthru
          _
        // Predicated region
        $region33: #{tpu_custom_call.1} parent=11 // pred_check
          %p267 = pneg %p169
        $region34: #{tpu_custom_call.1} parent=11 // pred_check_branch
          %269 = sbr.rel (%p267) target = $region36
        $region35: #{tpu_custom_call.1} parent=11 // pred_region
          _
        $region36: #{tpu_custom_call.1} parent=11 // pred_fallthru
          _
        // Predicated region
        $region37: #{tpu_custom_call.1} parent=11 // pred_check
          %p270 = pneg %p190
        $region38: #{tpu_custom_call.1} parent=11 // pred_check_branch
          %272 = sbr.rel (%p270) target = $region40
        $region39: #{tpu_custom_call.1} parent=11 // pred_region
          _
        $region40: #{tpu_custom_call.1} parent=11 // pred_fallthru
          _
        // Predicated region
        $region41: #{tpu_custom_call.1} parent=11 // pred_check
          %p273 = pneg %p211
        $region42: #{tpu_custom_call.1} parent=11 // pred_check_branch
          %275 = sbr.rel (%p273) target = $region44
        $region43: #{tpu_custom_call.1} parent=11 // pred_region
          _
        $region44: #{tpu_custom_call.1} parent=11 // pred_fallthru
          _
      $region12: #{tpu_custom_call.1} parent=5 // pred_fallthru
        _
      %p276 = scmp.lt.s32.totalorder %s17, 2
      // Predicated region
      $region45: #{tpu_custom_call.1} parent=5 // pred_check
        %p277 = pneg %p276
      $region46: #{tpu_custom_call.1} parent=5 // pred_check_branch
        %279 = sbr.rel (%p277) target = $region48
      $region47: #{tpu_custom_call.1} parent=5 // pred_region
        // Predicated region
        $region49: #{tpu_custom_call.1} parent=47 // pred_check
          %p280 = pneg %p37
        $region50: #{tpu_custom_call.1} parent=47 // pred_check_branch
          %282 = sbr.rel (%p280) target = $region52
        $region51: #{tpu_custom_call.1} parent=47 // pred_region
          %s283 = sand.u32 %s27, 1
          %s284 = sand.u32 %s27, 1
          %s285 = smul.addr %s284, 256
          %s286 = scalar_lea.vmem [#allocation3], %s285
          %s287 = smul.addr %s17, 8
          %s288 = scalar_lea.vmem %s0, %s287
          // Predicated region
          $region53: #{tpu_custom_call.1} parent=51 // pred_check
            _
          $region54: #{tpu_custom_call.1} parent=51 // pred_check_branch
            %290 = sbr.rel (0) target = $region56
          $region55: #{tpu_custom_call.1} parent=51 // pred_region
            // Predicated region
            $region57: #{tpu_custom_call.1} parent=55 // pred_check
              _
            $region58: #{tpu_custom_call.1} parent=55 // pred_check_branch
              %292 = sbr.rel (0) target = $region60
            $region59: #{tpu_custom_call.1} parent=55 // pred_region
              // Predicated region
              $region72: #{tpu_custom_call.1} parent=59 // pred_check
                _
              $region73: #{tpu_custom_call.1} parent=59 // pred_check_branch
                %369 = sbr.rel (0) target = $region75
              $region74: #{tpu_custom_call.1} parent=59 // pred_region
                loop: start=0, step=1, limit=1
                $region76: #{tpu_custom_call.1} parent=74 // loop_pre_header
                  _
                $region77: #{tpu_custom_call.1} parent=74 // loop_header
                  %s371 = sphi 0, %s375
                  %p372 = scmp.ge.s32.totalorder %s371, 1
                  %s376 = sphi %s288, %s288
                  %s377 = sphi %s286, %s286
                $region78: #{tpu_custom_call.1} parent=74 // loop_header_branch
                  %374 = sbr.rel (%p372) target = $region82
                $region79: #{tpu_custom_call.1} parent=74 // loop_body
                  %v378 = vld [vmem:[%s376] sm:$0xff]
                  %379 = vst [vmem:[%s377] sm:$0xff] %v378
                  %v380 = vld [vmem:[%s376 + $0x10] sm:$0xff]
                  %381 = vst [vmem:[%s377 + $0x8] sm:$0xff] %v380
                  %v382 = vld [vmem:[%s376 + $0x20] sm:$0xff]
                  %383 = vst [vmem:[%s377 + $0x10] sm:$0xff] %v382
                  %v384 = vld [vmem:[%s376 + $0x30] sm:$0xff]
                  %385 = vst [vmem:[%s377 + $0x18] sm:$0xff] %v384
                  %v386 = vld [vmem:[%s376 + $0x40] sm:$0xff]
                  %387 = vst [vmem:[%s377 + $0x20] sm:$0xff] %v386
                  %v388 = vld [vmem:[%s376 + $0x50] sm:$0xff]
                  %389 = vst [vmem:[%s377 + $0x28] sm:$0xff] %v388
                  %v390 = vld [vmem:[%s376 + $0x60] sm:$0xff]
                  %391 = vst [vmem:[%s377 + $0x30] sm:$0xff] %v390
                  %v392 = vld [vmem:[%s376 + $0x70] sm:$0xff]
                  %393 = vst [vmem:[%s377 + $0x38] sm:$0xff] %v392
                  %v394 = vld [vmem:[%s376 + $0x80] sm:$0xff]
                  %395 = vst [vmem:[%s377 + $0x40] sm:$0xff] %v394
                  %v396 = vld [vmem:[%s376 + $0x90] sm:$0xff]
                  %397 = vst [vmem:[%s377 + $0x48] sm:$0xff] %v396
                  %v398 = vld [vmem:[%s376 + $0xa0] sm:$0xff]
                  %399 = vst [vmem:[%s377 + $0x50] sm:$0xff] %v398
                  %v400 = vld [vmem:[%s376 + $0xb0] sm:$0xff]
                  %401 = vst [vmem:[%s377 + $0x58] sm:$0xff] %v400
                  %v402 = vld [vmem:[%s376 + $0xc0] sm:$0xff]
                  %403 = vst [vmem:[%s377 + $0x60] sm:$0xff] %v402
                  %v404 = vld [vmem:[%s376 + $0xd0] sm:$0xff]
                  %405 = vst [vmem:[%s377 + $0x68] sm:$0xff] %v404
                  %v406 = vld [vmem:[%s376 + $0xe0] sm:$0xff]
                  %407 = vst [vmem:[%s377 + $0x70] sm:$0xff] %v406
                  %v408 = vld [vmem:[%s376 + $0xf0] sm:$0xff]
                  %409 = vst [vmem:[%s377 + $0x78] sm:$0xff] %v408
                  %v410 = vld [vmem:[%s376 + $0x100] sm:$0xff]
                  %411 = vst [vmem:[%s377 + $0x80] sm:$0xff] %v410
                  %v412 = vld [vmem:[%s376 + $0x110] sm:$0xff]
                  %413 = vst [vmem:[%s377 + $0x88] sm:$0xff] %v412
                  %v414 = vld [vmem:[%s376 + $0x120] sm:$0xff]
                  %415 = vst [vmem:[%s377 + $0x90] sm:$0xff] %v414
                  %v416 = vld [vmem:[%s376 + $0x130] sm:$0xff]
                  %417 = vst [vmem:[%s377 + $0x98] sm:$0xff] %v416
                  %v418 = vld [vmem:[%s376 + $0x140] sm:$0xff]
                  %419 = vst [vmem:[%s377 + $0xa0] sm:$0xff] %v418
                  %v420 = vld [vmem:[%s376 + $0x150] sm:$0xff]
                  %421 = vst [vmem:[%s377 + $0xa8] sm:$0xff] %v420
                  %v422 = vld [vmem:[%s376 + $0x160] sm:$0xff]
                  %423 = vst [vmem:[%s377 + $0xb0] sm:$0xff] %v422
                  %v424 = vld [vmem:[%s376 + $0x170] sm:$0xff]
                  %425 = vst [vmem:[%s377 + $0xb8] sm:$0xff] %v424
                  %v426 = vld [vmem:[%s376 + $0x180] sm:$0xff]
                  %427 = vst [vmem:[%s377 + $0xc0] sm:$0xff] %v426
                  %v428 = vld [vmem:[%s376 + $0x190] sm:$0xff]
                  %429 = vst [vmem:[%s377 + $0xc8] sm:$0xff] %v428
                  %v430 = vld [vmem:[%s376 + $0x1a0] sm:$0xff]
                  %431 = vst [vmem:[%s377 + $0xd0] sm:$0xff] %v430
                  %v432 = vld [vmem:[%s376 + $0x1b0] sm:$0xff]
                  %433 = vst [vmem:[%s377 + $0xd8] sm:$0xff] %v432
                  %v434 = vld [vmem:[%s376 + $0x1c0] sm:$0xff]
                  %435 = vst [vmem:[%s377 + $0xe0] sm:$0xff] %v434
                  %v436 = vld [vmem:[%s376 + $0x1d0] sm:$0xff]
                  %437 = vst [vmem:[%s377 + $0xe8] sm:$0xff] %v436
                  %v438 = vld [vmem:[%s376 + $0x1e0] sm:$0xff]
                  %439 = vst [vmem:[%s377 + $0xf0] sm:$0xff] %v438
                  %v440 = vld [vmem:[%s376 + $0x1f0] sm:$0xff]
                  %441 = vst [vmem:[%s377 + $0xf8] sm:$0xff] %v440
                $region80: #{tpu_custom_call.1} parent=74 // loop_footer
                  %s375 = sadd.s32 1, %s371
                $region81: #{tpu_custom_call.1} parent=74 // loop_footer_branch
                  %370 = sbr.rel target = $region77
                $region82: #{tpu_custom_call.1} parent=74 // loop_exit
                  _
              $region75: #{tpu_custom_call.1} parent=59 // pred_fallthru
                _
              // Predicated region
              $region83: #{tpu_custom_call.1} parent=59 // pred_check
                _
              $region84: #{tpu_custom_call.1} parent=59 // pred_check_branch
                %443 = sbr.rel target = $region86
              $region85: #{tpu_custom_call.1} parent=59 // pred_region
                _
              $region86: #{tpu_custom_call.1} parent=59 // pred_fallthru
                _
            $region60: #{tpu_custom_call.1} parent=55 // pred_fallthru
              _
            // Predicated region
            $region61: #{tpu_custom_call.1} parent=55 // pred_check
              _
            $region62: #{tpu_custom_call.1} parent=55 // pred_check_branch
              %294 = sbr.rel target = $region64
            $region63: #{tpu_custom_call.1} parent=55 // pred_region
              loop: start=0, step=1, limit=1
              $region65: #{tpu_custom_call.1} parent=63 // loop_pre_header
                _
              $region66: #{tpu_custom_call.1} parent=63 // loop_header
                %s297 = sphi 0, %s301
                %p298 = scmp.ge.s32.totalorder %s297, 1
                %s302 = sphi %s288, %s288
                %s303 = sphi %s286, %s286
              $region67: #{tpu_custom_call.1} parent=63 // loop_header_branch
                %300 = sbr.rel (%p298) target = $region71
              $region68: #{tpu_custom_call.1} parent=63 // loop_body
                %v304 = vld [vmem:[%s302] sm:$0xff]
                %305 = vst [vmem:[%s303] sm:$0xff] %v304
                %v306 = vld [vmem:[%s302 + $0x10] sm:$0xff]
                %307 = vst [vmem:[%s303 + $0x8] sm:$0xff] %v306
                %v308 = vld [vmem:[%s302 + $0x20] sm:$0xff]
                %309 = vst [vmem:[%s303 + $0x10] sm:$0xff] %v308
                %v310 = vld [vmem:[%s302 + $0x30] sm:$0xff]
                %311 = vst [vmem:[%s303 + $0x18] sm:$0xff] %v310
                %v312 = vld [vmem:[%s302 + $0x40] sm:$0xff]
                %313 = vst [vmem:[%s303 + $0x20] sm:$0xff] %v312
                %v314 = vld [vmem:[%s302 + $0x50] sm:$0xff]
                %315 = vst [vmem:[%s303 + $0x28] sm:$0xff] %v314
                %v316 = vld [vmem:[%s302 + $0x60] sm:$0xff]
                %317 = vst [vmem:[%s303 + $0x30] sm:$0xff] %v316
                %v318 = vld [vmem:[%s302 + $0x70] sm:$0xff]
                %319 = vst [vmem:[%s303 + $0x38] sm:$0xff] %v318
                %v320 = vld [vmem:[%s302 + $0x80] sm:$0xff]
                %321 = vst [vmem:[%s303 + $0x40] sm:$0xff] %v320
                %v322 = vld [vmem:[%s302 + $0x90] sm:$0xff]
                %323 = vst [vmem:[%s303 + $0x48] sm:$0xff] %v322
                %v324 = vld [vmem:[%s302 + $0xa0] sm:$0xff]
                %325 = vst [vmem:[%s303 + $0x50] sm:$0xff] %v324
                %v326 = vld [vmem:[%s302 + $0xb0] sm:$0xff]
                %327 = vst [vmem:[%s303 + $0x58] sm:$0xff] %v326
                %v328 = vld [vmem:[%s302 + $0xc0] sm:$0xff]
                %329 = vst [vmem:[%s303 + $0x60] sm:$0xff] %v328
                %v330 = vld [vmem:[%s302 + $0xd0] sm:$0xff]
                %331 = vst [vmem:[%s303 + $0x68] sm:$0xff] %v330
                %v332 = vld [vmem:[%s302 + $0xe0] sm:$0xff]
                %333 = vst [vmem:[%s303 + $0x70] sm:$0xff] %v332
                %v334 = vld [vmem:[%s302 + $0xf0] sm:$0xff]
                %335 = vst [vmem:[%s303 + $0x78] sm:$0xff] %v334
                %v336 = vld [vmem:[%s302 + $0x100] sm:$0xff]
                %337 = vst [vmem:[%s303 + $0x80] sm:$0xff] %v336
                %v338 = vld [vmem:[%s302 + $0x110] sm:$0xff]
                %339 = vst [vmem:[%s303 + $0x88] sm:$0xff] %v338
                %v340 = vld [vmem:[%s302 + $0x120] sm:$0xff]
                %341 = vst [vmem:[%s303 + $0x90] sm:$0xff] %v340
                %v342 = vld [vmem:[%s302 + $0x130] sm:$0xff]
                %343 = vst [vmem:[%s303 + $0x98] sm:$0xff] %v342
                %v344 = vld [vmem:[%s302 + $0x140] sm:$0xff]
                %345 = vst [vmem:[%s303 + $0xa0] sm:$0xff] %v344
                %v346 = vld [vmem:[%s302 + $0x150] sm:$0xff]
                %347 = vst [vmem:[%s303 + $0xa8] sm:$0xff] %v346
                %v348 = vld [vmem:[%s302 + $0x160] sm:$0xff]
                %349 = vst [vmem:[%s303 + $0xb0] sm:$0xff] %v348
                %v350 = vld [vmem:[%s302 + $0x170] sm:$0xff]
                %351 = vst [vmem:[%s303 + $0xb8] sm:$0xff] %v350
                %v352 = vld [vmem:[%s302 + $0x180] sm:$0xff]
                %353 = vst [vmem:[%s303 + $0xc0] sm:$0xff] %v352
                %v354 = vld [vmem:[%s302 + $0x190] sm:$0xff]
                %355 = vst [vmem:[%s303 + $0xc8] sm:$0xff] %v354
                %v356 = vld [vmem:[%s302 + $0x1a0] sm:$0xff]
                %357 = vst [vmem:[%s303 + $0xd0] sm:$0xff] %v356
                %v358 = vld [vmem:[%s302 + $0x1b0] sm:$0xff]
                %359 = vst [vmem:[%s303 + $0xd8] sm:$0xff] %v358
                %v360 = vld [vmem:[%s302 + $0x1c0] sm:$0xff]
                %361 = vst [vmem:[%s303 + $0xe0] sm:$0xff] %v360
                %v362 = vld [vmem:[%s302 + $0x1d0] sm:$0xff]
                %363 = vst [vmem:[%s303 + $0xe8] sm:$0xff] %v362
                %v364 = vld [vmem:[%s302 + $0x1e0] sm:$0xff]
                %365 = vst [vmem:[%s303 + $0xf0] sm:$0xff] %v364
                %v366 = vld [vmem:[%s302 + $0x1f0] sm:$0xff]
                %367 = vst [vmem:[%s303 + $0xf8] sm:$0xff] %v366
              $region69: #{tpu_custom_call.1} parent=63 // loop_footer
                %s301 = sadd.s32 1, %s297
              $region70: #{tpu_custom_call.1} parent=63 // loop_footer_branch
                %296 = sbr.rel target = $region66
              $region71: #{tpu_custom_call.1} parent=63 // loop_exit
                _
            $region64: #{tpu_custom_call.1} parent=55 // pred_fallthru
              _
          $region56: #{tpu_custom_call.1} parent=51 // pred_fallthru
            _
          %444 = vnop
        $region52: #{tpu_custom_call.1} parent=47 // pred_fallthru
          _
      $region48: #{tpu_custom_call.1} parent=5 // pred_fallthru
        _
      %p445 = scmp.le.s32.totalorder 1, %s17
      %p446 = scmp.lt.s32.totalorder %s17, 3
      %p447 = pnand %p445, %p446
      %p448 = pneg %p447
      // Predicated region
      $region87: #{tpu_custom_call.1} parent=5 // pred_check
        _
      $region88: #{tpu_custom_call.1} parent=5 // pred_check_branch
        %450 = sbr.rel (%p447) target = $region90
      $region89: #{tpu_custom_call.1} parent=5 // pred_region
        %s451 = ssub.s32 %s17, 1
        %s452 = sand.u32 %s30, 1
        %s453 = sand.u32 %s30, 1
        %s454 = smul.addr %s453, 256
        %s455 = scalar_lea.vmem [#allocation3], %s454
        // Predicated region
        $region91: #{tpu_custom_call.1} parent=89 // pred_check
          %p456 = pneg %p43
        $region92: #{tpu_custom_call.1} parent=89 // pred_check_branch
          %458 = sbr.rel (%p456) target = $region94
        $region93: #{tpu_custom_call.1} parent=89 // pred_region
          _
        $region94: #{tpu_custom_call.1} parent=89 // pred_fallthru
          _
        %s459 = sand.u32 %s30, 1
        %s460 = sand.u32 %s30, 1
        %s461 = smul.addr %s460, 256
        %s462 = scalar_lea.vmem [#allocation3], %s461
        %p463 = pneg %p43
        %p464 = pneg %p40
        %p465 = pneg %p64
        %p466 = pneg %p61
        %p467 = pneg %p85
        %p468 = pneg %p82
        %p469 = pneg %p106
        %p470 = pneg %p103
        %p471 = pneg %p127
        %p472 = pneg %p124
        %p473 = pneg %p148
        %p474 = pneg %p145
        %p475 = pneg %p169
        %p476 = pneg %p166
        %p477 = pneg %p190
        %p478 = pneg %p187
        %p479 = pneg %p211
        %p480 = pneg %p208
        %p481 = pneg %p237
        %p482 = pneg %p234
        %p483 = scmp.lt.s32.totalorder %s22, 1
        %s484 = scalar_select %p483, %s22, 1
        %s485 = smul.addr %s484, 8
        %s486 = scalar_lea.vmem %s9, %s485
        %p487 = scmp.lt.s32.totalorder %s22, 1
        %s488 = scalar_select %p487, %s22, 1
        %s489 = smul.addr %s488, 8
        %s490 = scalar_lea.vmem %s9, %s489
        %v491 = vld [vmem:[%s455] sm:$0xff]
        %v492 = vld [vmem:[%s455 + $0x8] sm:$0xff]
        %v493 = vld [vmem:[%s455 + $0x10] sm:$0xff]
        %v494 = vld [vmem:[%s455 + $0x18] sm:$0xff]
        %v495 = vld [vmem:[%s455 + $0x20] sm:$0xff]
        %v496 = vld [vmem:[%s455 + $0x28] sm:$0xff]
        %v497 = vld [vmem:[%s455 + $0x30] sm:$0xff]
        %v498 = vld [vmem:[%s455 + $0x38] sm:$0xff]
        %v499 = vld [vmem:[%s455 + $0x40] sm:$0xff]
        %v500 = vld [vmem:[%s455 + $0x48] sm:$0xff]
        %v501 = vld [vmem:[%s455 + $0x50] sm:$0xff]
        %v502 = vld [vmem:[%s455 + $0x58] sm:$0xff]
        %v503 = vld [vmem:[%s455 + $0x60] sm:$0xff]
        %v504 = vld [vmem:[%s455 + $0x68] sm:$0xff]
        %v505 = vld [vmem:[%s455 + $0x70] sm:$0xff]
        %v506 = vld [vmem:[%s455 + $0x78] sm:$0xff]
        %v507 = vld [vmem:[%s455 + $0x80] sm:$0xff]
        %v508 = vld [vmem:[%s455 + $0x88] sm:$0xff]
        %v509 = vld [vmem:[%s455 + $0x90] sm:$0xff]
        %v510 = vld [vmem:[%s455 + $0x98] sm:$0xff]
        %v511 = vld [vmem:[%s455 + $0xa0] sm:$0xff]
        %v512 = vld [vmem:[%s455 + $0xa8] sm:$0xff]
        %v513 = vld [vmem:[%s455 + $0xb0] sm:$0xff]
        %v514 = vld [vmem:[%s455 + $0xb8] sm:$0xff]
        %v515 = vld [vmem:[%s455 + $0xc0] sm:$0xff]
        %v516 = vld [vmem:[%s455 + $0xc8] sm:$0xff]
        %v517 = vld [vmem:[%s455 + $0xd0] sm:$0xff]
        %v518 = vld [vmem:[%s455 + $0xd8] sm:$0xff]
        %v519 = vld [vmem:[%s455 + $0xe0] sm:$0xff]
        %v520 = vld [vmem:[%s455 + $0xe8] sm:$0xff]
        %v521 = vld [vmem:[%s455 + $0xf0] sm:$0xff]
        %v522 = vld [vmem:[%s455 + $0xf8] sm:$0xff]
        %v523 = vld [vmem:[%s1] sm:$0xff]
        %v524 = vld [vmem:[%s1 + $0x8] sm:$0xf]
        %s525 = scalar_lea.vmem %s1, 16
        %v526 = vld [vmem:[%s525] sm:$0xff]
        %v527 = vld [vmem:[%s525 + $0x8] sm:$0xf]
        %vm528 = vcmask 97280
        %v530 = vsel %vm528, %v492, 0
        %v533 = vsel %vm528, %v493, 0
        %v536 = vsel %vm528, %v494, 0
        %v539 = vsel %vm528, %v495, 0
        %v542 = vsel %vm528, %v496, 0
        %v545 = vsel %vm528, %v497, 0
        %v548 = vsel %vm528, %v498, 0
        %v551 = vsel %vm528, %v499, 0
        %v554 = vsel %vm528, %v500, 0
        %v557 = vsel %vm528, %v501, 0
        %v560 = vsel %vm528, %v502, 0
        %v563 = vsel %vm528, %v503, 0
        %v566 = vsel %vm528, %v504, 0
        %v569 = vsel %vm528, %v505, 0
        %v572 = vsel %vm528, %v506, 0
        %v575 = vsel %vm528, %v507, 0
        %v578 = vsel %vm528, %v508, 0
        %v581 = vsel %vm528, %v509, 0
        %v584 = vsel %vm528, %v510, 0
        %v587 = vsel %vm528, %v511, 0
        %v590 = vsel %vm528, %v512, 0
        %v593 = vsel %vm528, %v513, 0
        %v596 = vsel %vm528, %v514, 0
        %v599 = vsel %vm528, %v515, 0
        %v602 = vsel %vm528, %v516, 0
        %v605 = vsel %vm528, %v517, 0
        %v608 = vsel %vm528, %v518, 0
        %v611 = vsel %vm528, %v519, 0
        %v614 = vsel %vm528, %v520, 0
        %v617 = vsel %vm528, %v521, 0
        %vm619 = vcmask 1043456
        %v621 = vsel %vm619, %v527, 0
        %623 = vmatprep.subr.mxu0 0.0
        %624 = vmatpush1.msra.mxu0 %v526
        %625 = vmatprep.subr.mxu0 0.0
        %626 = vmatpush1.msra.mxu0 %v621
        %627 = vmatprep.subr.mxu0 0.0
        %628 = vmatpush1.msra.mxu0 0.0
        %629 = vmatprep.subr.mxu0 0.0
        %630 = vmatpush1.msra.mxu0 0.0
        %631 = vmatprep.subr.mxu0 0.0
        %632 = vmatpush1.msra.mxu0 0.0
        %633 = vmatprep.subr.mxu0 0.0
        %634 = vmatpush1.msra.mxu0 0.0
        %635 = vmatprep.subr.mxu0 0.0
        %636 = vmatpush1.msra.mxu0 0.0
        %637 = vmatprep.subr.mxu0 0.0
        %638 = vmatpush1.msra.mxu0 0.0
        %639 = vmatprep.subr.mxu0 0.0
        %640 = vmatpush1.msra.mxu0 0.0
        %641 = vmatprep.subr.mxu0 0.0
        %642 = vmatpush1.msra.mxu0 0.0
        %643 = vmatprep.subr.mxu0 0.0
        %644 = vmatpush1.msra.mxu0 0.0
        %645 = vmatprep.subr.mxu0 0.0
        %646 = vmatpush1.msra.mxu0 0.0
        %647 = vmatprep.subr.mxu0 0.0
        %648 = vmatpush1.msra.mxu0 0.0
        %649 = vmatprep.subr.mxu0 0.0
        %650 = vmatpush1.msra.mxu0 0.0
        %651 = vmatprep.subr.mxu0 0.0
        %652 = vmatpush1.msra.mxu0 0.0
        %653 = vmatprep.subr.mxu0 0.0
        %654 = vmatpush1.msra.mxu0 0.0
        %655 = vmatprep.subr.mxu0 0.0
        %656 = vmatpush1.msra.mxu0 0.0
        %657 = vmatprep.subr.mxu0 0.0
        %658 = vmatpush1.msra.mxu0 0.0
        %659 = vmatprep.subr.mxu0 0.0
        %660 = vmatpush1.msra.mxu0 0.0
        %661 = vmatprep.subr.mxu0 0.0
        %662 = vmatpush1.msra.mxu0 0.0
        %663 = vmatprep.subr.mxu0 0.0
        %664 = vmatpush1.msra.mxu0 0.0
        %665 = vmatprep.subr.mxu0 0.0
        %666 = vmatpush1.msra.mxu0 0.0
        %667 = vmatprep.subr.mxu0 0.0
        %668 = vmatpush1.msra.mxu0 0.0
        %669 = vmatprep.subr.mxu0 0.0
        %670 = vmatpush1.msra.mxu0 0.0
        %671 = vmatprep.subr.mxu0 0.0
        %672 = vmatpush1.msra.mxu0 0.0
        %673 = vmatprep.subr.mxu0 0.0
        %674 = vmatpush1.msra.mxu0 0.0
        %675 = vmatprep.subr.mxu0 0.0
        %676 = vmatpush1.msra.mxu0 0.0
        %677 = vmatprep.subr.mxu0 0.0
        %678 = vmatpush1.msra.mxu0 0.0
        %679 = vmatprep.subr.mxu0 0.0
        %680 = vmatpush1.msra.mxu0 0.0
        %681 = vmatprep.subr.mxu0 0.0
        %682 = vmatpush1.msra.mxu0 0.0
        %683 = vmatprep.subr.mxu0 0.0
        %684 = vmatpush1.msra.mxu0 0.0
        %685 = vmatprep.subr.mxu0 0.0
        %686 = vmatpush1.msra.mxu0 0.0
        %687 = vmatprep.mubr.f32.mxu0 0.0
        %688 = vmatmul.mubr.f32.gmra.mrb[0].mxu0 %v530
        %v689 = vpop.f32.mrb[0].mxu0
        %v690 = vadd.f32 0.0, %v689
        %v691 = vpop.f32.mrb[0].mxu0
        %692 = vmatprep.mubr.f32.mxu0 0.0
        %693 = vmatmul.mubr.f32.gmra.mrb[0].mxu0 %v533
        %v694 = vpop.f32.mrb[0].mxu0
        %v695 = vadd.f32 0.0, %v694
        %v696 = vpop.f32.mrb[0].mxu0
        %697 = vmatprep.mubr.f32.mxu0 0.0
        %698 = vmatmul.mubr.f32.gmra.mrb[0].mxu0 %v536
        %v699 = vpop.f32.mrb[0].mxu0
        %v700 = vadd.f32 0.0, %v699
        %v701 = vpop.f32.mrb[0].mxu0
        %702 = vmatprep.mubr.f32.mxu0 0.0
        %703 = vmatmul.mubr.f32.gmra.mrb[0].mxu0 %v539
        %v704 = vpop.f32.mrb[0].mxu0
        %v705 = vadd.f32 0.0, %v704
        %v706 = vpop.f32.mrb[0].mxu0
        %707 = vmatprep.mubr.f32.mxu0 0.0
        %708 = vmatmul.mubr.f32.gmra.mrb[0].mxu0 %v542
        %v709 = vpop.f32.mrb[0].mxu0
        %v710 = vadd.f32 0.0, %v709
        %v711 = vpop.f32.mrb[0].mxu0
        %712 = vmatprep.mubr.f32.mxu0 0.0
        %713 = vmatmul.mubr.f32.gmra.mrb[0].mxu0 %v545
        %v714 = vpop.f32.mrb[0].mxu0
        %v715 = vadd.f32 0.0, %v714
        %v716 = vpop.f32.mrb[0].mxu0
        %717 = vmatprep.mubr.f32.mxu0 0.0
        %718 = vmatmul.mubr.f32.gmra.mrb[0].mxu0 %v548
        %v719 = vpop.f32.mrb[0].mxu0
        %v720 = vadd.f32 0.0, %v719
        %v721 = vpop.f32.mrb[0].mxu0
        %722 = vmatprep.mubr.f32.mxu0 0.0
        %723 = vmatmul.mubr.f32.gmra.mrb[0].mxu0 %v551
        %v724 = vpop.f32.mrb[0].mxu0
        %v725 = vadd.f32 0.0, %v724
        %v726 = vpop.f32.mrb[0].mxu0
        %727 = vmatprep.mubr.f32.mxu0 0.0
        %728 = vmatmul.mubr.f32.gmra.mrb[0].mxu0 %v554
        %v729 = vpop.f32.mrb[0].mxu0
        %v730 = vadd.f32 0.0, %v729
        %v731 = vpop.f32.mrb[0].mxu0
        %732 = vmatprep.mubr.f32.mxu0 0.0
        %733 = vmatmul.mubr.f32.gmra.mrb[0].mxu0 %v557
        %v734 = vpop.f32.mrb[0].mxu0
        %v735 = vadd.f32 0.0, %v734
        %v736 = vpop.f32.mrb[0].mxu0
        %737 = vmatprep.mubr.f32.mxu0 0.0
        %738 = vmatmul.mubr.f32.gmra.mrb[0].mxu0 %v560
        %v739 = vpop.f32.mrb[0].mxu0
        %v740 = vadd.f32 0.0, %v739
        %v741 = vpop.f32.mrb[0].mxu0
        %742 = vmatprep.mubr.f32.mxu0 0.0
        %743 = vmatmul.mubr.f32.gmra.mrb[0].mxu0 %v563
        %v744 = vpop.f32.mrb[0].mxu0
        %v745 = vadd.f32 0.0, %v744
        %v746 = vpop.f32.mrb[0].mxu0
        %747 = vmatprep.mubr.f32.mxu0 0.0
        %748 = vmatmul.mubr.f32.gmra.mrb[0].mxu0 %v566
        %v749 = vpop.f32.mrb[0].mxu0
        %v750 = vadd.f32 0.0, %v749
        %v751 = vpop.f32.mrb[0].mxu0
        %752 = vmatprep.mubr.f32.mxu0 0.0
        %753 = vmatmul.mubr.f32.gmra.mrb[0].mxu0 %v569
        %v754 = vpop.f32.mrb[0].mxu0
        %v755 = vadd.f32 0.0, %v754
        %v756 = vpop.f32.mrb[0].mxu0
        %757 = vmatprep.mubr.f32.mxu0 0.0
        %758 = vmatmul.mubr.f32.gmra.mrb[0].mxu0 %v572
        %v759 = vpop.f32.mrb[0].mxu0
        %v760 = vadd.f32 0.0, %v759
        %v761 = vpop.f32.mrb[0].mxu0
        %762 = vmatprep.mubr.f32.mxu0 0.0
        %763 = vmatmul.mubr.f32.gmra.mrb[0].mxu0 %v575
        %v764 = vpop.f32.mrb[0].mxu0
        %v765 = vadd.f32 0.0, %v764
        %v766 = vpop.f32.mrb[0].mxu0
        %767 = vmatprep.mubr.f32.mxu0 0.0
        %768 = vmatmul.mubr.f32.gmra.mrb[0].mxu0 %v578
        %v769 = vpop.f32.mrb[0].mxu0
        %v770 = vadd.f32 0.0, %v769
        %v771 = vpop.f32.mrb[0].mxu0
        %772 = vmatprep.mubr.f32.mxu0 0.0
        %773 = vmatmul.mubr.f32.gmra.mrb[0].mxu0 %v581
        %v774 = vpop.f32.mrb[0].mxu0
        %v775 = vadd.f32 0.0, %v774
        %v776 = vpop.f32.mrb[0].mxu0
        %777 = vmatprep.mubr.f32.mxu0 0.0
        %778 = vmatmul.mubr.f32.gmra.mrb[0].mxu0 %v584
        %v779 = vpop.f32.mrb[0].mxu0
        %v780 = vadd.f32 0.0, %v779
        %v781 = vpop.f32.mrb[0].mxu0
        %782 = vmatprep.mubr.f32.mxu0 0.0
        %783 = vmatmul.mubr.f32.gmra.mrb[0].mxu0 %v587
        %v784 = vpop.f32.mrb[0].mxu0
        %v785 = vadd.f32 0.0, %v784
        %v786 = vpop.f32.mrb[0].mxu0
        %787 = vmatprep.mubr.f32.mxu0 0.0
        %788 = vmatmul.mubr.f32.gmra.mrb[0].mxu0 %v590
        %v789 = vpop.f32.mrb[0].mxu0
        %v790 = vadd.f32 0.0, %v789
        %v791 = vpop.f32.mrb[0].mxu0
        %792 = vmatprep.mubr.f32.mxu0 0.0
        %793 = vmatmul.mubr.f32.gmra.mrb[0].mxu0 %v593
        %v794 = vpop.f32.mrb[0].mxu0
        %v795 = vadd.f32 0.0, %v794
        %v796 = vpop.f32.mrb[0].mxu0
        %797 = vmatprep.mubr.f32.mxu0 0.0
        %798 = vmatmul.mubr.f32.gmra.mrb[0].mxu0 %v596
        %v799 = vpop.f32.mrb[0].mxu0
        %v800 = vadd.f32 0.0, %v799
        %v801 = vpop.f32.mrb[0].mxu0
        %802 = vmatprep.mubr.f32.mxu0 0.0
        %803 = vmatmul.mubr.f32.gmra.mrb[0].mxu0 %v599
        %v804 = vpop.f32.mrb[0].mxu0
        %v805 = vadd.f32 0.0, %v804
        %v806 = vpop.f32.mrb[0].mxu0
        %807 = vmatprep.mubr.f32.mxu0 0.0
        %808 = vmatmul.mubr.f32.gmra.mrb[0].mxu0 %v602
        %v809 = vpop.f32.mrb[0].mxu0
        %v810 = vadd.f32 0.0, %v809
        %v811 = vpop.f32.mrb[0].mxu0
        %812 = vmatprep.mubr.f32.mxu0 0.0
        %813 = vmatmul.mubr.f32.gmra.mrb[0].mxu0 %v605
        %v814 = vpop.f32.mrb[0].mxu0
        %v815 = vadd.f32 0.0, %v814
        %v816 = vpop.f32.mrb[0].mxu0
        %817 = vmatprep.mubr.f32.mxu0 0.0
        %818 = vmatmul.mubr.f32.gmra.mrb[0].mxu0 %v608
        %v819 = vpop.f32.mrb[0].mxu0
        %v820 = vadd.f32 0.0, %v819
        %v821 = vpop.f32.mrb[0].mxu0
        %822 = vmatprep.mubr.f32.mxu0 0.0
        %823 = vmatmul.mubr.f32.gmra.mrb[0].mxu0 %v611
        %v824 = vpop.f32.mrb[0].mxu0
        %v825 = vadd.f32 0.0, %v824
        %v826 = vpop.f32.mrb[0].mxu0
        %827 = vmatprep.mubr.f32.mxu0 0.0
        %828 = vmatmul.mubr.f32.gmra.mrb[0].mxu0 %v614
        %v829 = vpop.f32.mrb[0].mxu0
        %v830 = vadd.f32 0.0, %v829
        %v831 = vpop.f32.mrb[0].mxu0
        %832 = vmatprep.mubr.f32.mxu0 0.0
        %833 = vmatmul.mubr.f32.gmra.mrb[0].mxu0 %v617
        %v834 = vpop.f32.mrb[0].mxu0
        %v835 = vadd.f32 0.0, %v834
        %v836 = vpop.f32.mrb[0].mxu0
        %837 = vdwg.mxu0
        %v839 = vsel %vm528, %v491, 0
        %v842 = vsel %vm619, %v524, 0
        %844 = vmatprep.subr.mxu0 0.0
        %845 = vmatpush1.msra.mxu0 %v523
        %846 = vmatprep.subr.mxu0 0.0
        %847 = vmatpush1.msra.mxu0 %v842
        %848 = vmatprep.subr.mxu0 0.0
        %849 = vmatpush1.msra.mxu0 0.0
        %850 = vmatprep.subr.mxu0 0.0
        %851 = vmatpush1.msra.mxu0 0.0
        %852 = vmatprep.subr.mxu0 0.0
        %853 = vmatpush1.msra.mxu0 0.0
        %854 = vmatprep.subr.mxu0 0.0
        %855 = vmatpush1.msra.mxu0 0.0
        %856 = vmatprep.subr.mxu0 0.0
        %857 = vmatpush1.msra.mxu0 0.0
        %858 = vmatprep.subr.mxu0 0.0
        %859 = vmatpush1.msra.mxu0 0.0
        %860 = vmatprep.subr.mxu0 0.0
        %861 = vmatpush1.msra.mxu0 0.0
        %862 = vmatprep.subr.mxu0 0.0
        %863 = vmatpush1.msra.mxu0 0.0
        %864 = vmatprep.subr.mxu0 0.0
        %865 = vmatpush1.msra.mxu0 0.0
        %866 = vmatprep.subr.mxu0 0.0
        %867 = vmatpush1.msra.mxu0 0.0
        %868 = vmatprep.subr.mxu0 0.0
        %869 = vmatpush1.msra.mxu0 0.0
        %870 = vmatprep.subr.mxu0 0.0
        %871 = vmatpush1.msra.mxu0 0.0
        %872 = vmatprep.subr.mxu0 0.0
        %873 = vmatpush1.msra.mxu0 0.0
        %874 = vmatprep.subr.mxu0 0.0
        %875 = vmatpush1.msra.mxu0 0.0
        %876 = vmatprep.subr.mxu0 0.0
        %877 = vmatpush1.msra.mxu0 0.0
        %878 = vmatprep.subr.mxu0 0.0
        %879 = vmatpush1.msra.mxu0 0.0
        %880 = vmatprep.subr.mxu0 0.0
        %881 = vmatpush1.msra.mxu0 0.0
        %882 = vmatprep.subr.mxu0 0.0
        %883 = vmatpush1.msra.mxu0 0.0
        %884 = vmatprep.subr.mxu0 0.0
        %885 = vmatpush1.msra.mxu0 0.0
        %886 = vmatprep.subr.mxu0 0.0
        %887 = vmatpush1.msra.mxu0 0.0
        %888 = vmatprep.subr.mxu0 0.0
        %889 = vmatpush1.msra.mxu0 0.0
        %890 = vmatprep.subr.mxu0 0.0
        %891 = vmatpush1.msra.mxu0 0.0
        %892 = vmatprep.subr.mxu0 0.0
        %893 = vmatpush1.msra.mxu0 0.0
        %894 = vmatprep.subr.mxu0 0.0
        %895 = vmatpush1.msra.mxu0 0.0
        %896 = vmatprep.subr.mxu0 0.0
        %897 = vmatpush1.msra.mxu0 0.0
        %898 = vmatprep.subr.mxu0 0.0
        %899 = vmatpush1.msra.mxu0 0.0
        %900 = vmatprep.subr.mxu0 0.0
        %901 = vmatpush1.msra.mxu0 0.0
        %902 = vmatprep.subr.mxu0 0.0
        %903 = vmatpush1.msra.mxu0 0.0
        %904 = vmatprep.subr.mxu0 0.0
        %905 = vmatpush1.msra.mxu0 0.0
        %906 = vmatprep.subr.mxu0 0.0
        %907 = vmatpush1.msra.mxu0 0.0
        %908 = vmatprep.mubr.f32.mxu0 0.0
        %909 = vmatmul.mubr.f32.gmra.mrb[0].mxu0 %v839
        %v910 = vpop.f32.mrb[0].mxu0
        %v911 = vadd.f32 %v690, %v910
        %v912 = vpop.f32.mrb[0].mxu0
        %913 = vmatprep.mubr.f32.mxu0 0.0
        %914 = vmatmul.mubr.f32.gmra.mrb[0].mxu0 %v530
        %v915 = vpop.f32.mrb[0].mxu0
        %v916 = vadd.f32 %v695, %v915
        %v917 = vpop.f32.mrb[0].mxu0
        %918 = vmatprep.mubr.f32.mxu0 0.0
        %919 = vmatmul.mubr.f32.gmra.mrb[0].mxu0 %v533
        %v920 = vpop.f32.mrb[0].mxu0
        %v921 = vadd.f32 %v700, %v920
        %v922 = vpop.f32.mrb[0].mxu0
        %923 = vmatprep.mubr.f32.mxu0 0.0
        %924 = vmatmul.mubr.f32.gmra.mrb[0].mxu0 %v536
        %v925 = vpop.f32.mrb[0].mxu0
        %v926 = vadd.f32 %v705, %v925
        %v927 = vpop.f32.mrb[0].mxu0
        %928 = vmatprep.mubr.f32.mxu0 0.0
        %929 = vmatmul.mubr.f32.gmra.mrb[0].mxu0 %v539
        %v930 = vpop.f32.mrb[0].mxu0
        %v931 = vadd.f32 %v710, %v930
        %v932 = vpop.f32.mrb[0].mxu0
        %933 = vmatprep.mubr.f32.mxu0 0.0
        %934 = vmatmul.mubr.f32.gmra.mrb[0].mxu0 %v542
        %v935 = vpop.f32.mrb[0].mxu0
        %v936 = vadd.f32 %v715, %v935
        %v937 = vpop.f32.mrb[0].mxu0
        %938 = vmatprep.mubr.f32.mxu0 0.0
        %939 = vmatmul.mubr.f32.gmra.mrb[0].mxu0 %v545
        %v940 = vpop.f32.mrb[0].mxu0
        %v941 = vadd.f32 %v720, %v940
        %v942 = vpop.f32.mrb[0].mxu0
        %943 = vmatprep.mubr.f32.mxu0 0.0
        %944 = vmatmul.mubr.f32.gmra.mrb[0].mxu0 %v548
        %v945 = vpop.f32.mrb[0].mxu0
        %v946 = vadd.f32 %v725, %v945
        %v947 = vpop.f32.mrb[0].mxu0
        %948 = vmatprep.mubr.f32.mxu0 0.0
        %949 = vmatmul.mubr.f32.gmra.mrb[0].mxu0 %v551
        %v950 = vpop.f32.mrb[0].mxu0
        %v951 = vadd.f32 %v730, %v950
        %v952 = vpop.f32.mrb[0].mxu0
        %953 = vmatprep.mubr.f32.mxu0 0.0
        %954 = vmatmul.mubr.f32.gmra.mrb[0].mxu0 %v554
        %v955 = vpop.f32.mrb[0].mxu0
        %v956 = vadd.f32 %v735, %v955
        %v957 = vpop.f32.mrb[0].mxu0
        %958 = vmatprep.mubr.f32.mxu0 0.0
        %959 = vmatmul.mubr.f32.gmra.mrb[0].mxu0 %v557
        %v960 = vpop.f32.mrb[0].mxu0
        %v961 = vadd.f32 %v740, %v960
        %v962 = vpop.f32.mrb[0].mxu0
        %963 = vmatprep.mubr.f32.mxu0 0.0
        %964 = vmatmul.mubr.f32.gmra.mrb[0].mxu0 %v560
        %v965 = vpop.f32.mrb[0].mxu0
        %v966 = vadd.f32 %v745, %v965
        %v967 = vpop.f32.mrb[0].mxu0
        %968 = vmatprep.mubr.f32.mxu0 0.0
        %969 = vmatmul.mubr.f32.gmra.mrb[0].mxu0 %v563
        %v970 = vpop.f32.mrb[0].mxu0
        %v971 = vadd.f32 %v750, %v970
        %v972 = vpop.f32.mrb[0].mxu0
        %973 = vmatprep.mubr.f32.mxu0 0.0
        %974 = vmatmul.mubr.f32.gmra.mrb[0].mxu0 %v566
        %v975 = vpop.f32.mrb[0].mxu0
        %v976 = vadd.f32 %v755, %v975
        %v977 = vpop.f32.mrb[0].mxu0
        %978 = vmatprep.mubr.f32.mxu0 0.0
        %979 = vmatmul.mubr.f32.gmra.mrb[0].mxu0 %v569
        %v980 = vpop.f32.mrb[0].mxu0
        %v981 = vadd.f32 %v760, %v980
        %v982 = vpop.f32.mrb[0].mxu0
        %983 = vmatprep.mubr.f32.mxu0 0.0
        %984 = vmatmul.mubr.f32.gmra.mrb[0].mxu0 %v572
        %v985 = vpop.f32.mrb[0].mxu0
        %v986 = vadd.f32 %v765, %v985
        %v987 = vpop.f32.mrb[0].mxu0
        %988 = vmatprep.mubr.f32.mxu0 0.0
        %989 = vmatmul.mubr.f32.gmra.mrb[0].mxu0 %v575
        %v990 = vpop.f32.mrb[0].mxu0
        %v991 = vadd.f32 %v770, %v990
        %v992 = vpop.f32.mrb[0].mxu0
        %993 = vmatprep.mubr.f32.mxu0 0.0
        %994 = vmatmul.mubr.f32.gmra.mrb[0].mxu0 %v578
        %v995 = vpop.f32.mrb[0].mxu0
        %v996 = vadd.f32 %v775, %v995
        %v997 = vpop.f32.mrb[0].mxu0
        %998 = vmatprep.mubr.f32.mxu0 0.0
        %999 = vmatmul.mubr.f32.gmra.mrb[0].mxu0 %v581
        %v1000 = vpop.f32.mrb[0].mxu0
        %v1001 = vadd.f32 %v780, %v1000
        %v1002 = vpop.f32.mrb[0].mxu0
        %1003 = vmatprep.mubr.f32.mxu0 0.0
        %1004 = vmatmul.mubr.f32.gmra.mrb[0].mxu0 %v584
        %v1005 = vpop.f32.mrb[0].mxu0
        %v1006 = vadd.f32 %v785, %v1005
        %v1007 = vpop.f32.mrb[0].mxu0
        %1008 = vmatprep.mubr.f32.mxu0 0.0
        %1009 = vmatmul.mubr.f32.gmra.mrb[0].mxu0 %v587
        %v1010 = vpop.f32.mrb[0].mxu0
        %v1011 = vadd.f32 %v790, %v1010
        %v1012 = vpop.f32.mrb[0].mxu0
        %1013 = vmatprep.mubr.f32.mxu0 0.0
        %1014 = vmatmul.mubr.f32.gmra.mrb[0].mxu0 %v590
        %v1015 = vpop.f32.mrb[0].mxu0
        %v1016 = vadd.f32 %v795, %v1015
        %v1017 = vpop.f32.mrb[0].mxu0
        %1018 = vmatprep.mubr.f32.mxu0 0.0
        %1019 = vmatmul.mubr.f32.gmra.mrb[0].mxu0 %v593
        %v1020 = vpop.f32.mrb[0].mxu0
        %v1021 = vadd.f32 %v800, %v1020
        %v1022 = vpop.f32.mrb[0].mxu0
        %1023 = vmatprep.mubr.f32.mxu0 0.0
        %1024 = vmatmul.mubr.f32.gmra.mrb[0].mxu0 %v596
        %v1025 = vpop.f32.mrb[0].mxu0
        %v1026 = vadd.f32 %v805, %v1025
        %v1027 = vpop.f32.mrb[0].mxu0
        %1028 = vmatprep.mubr.f32.mxu0 0.0
        %1029 = vmatmul.mubr.f32.gmra.mrb[0].mxu0 %v599
        %v1030 = vpop.f32.mrb[0].mxu0
        %v1031 = vadd.f32 %v810, %v1030
        %v1032 = vpop.f32.mrb[0].mxu0
        %1033 = vmatprep.mubr.f32.mxu0 0.0
        %1034 = vmatmul.mubr.f32.gmra.mrb[0].mxu0 %v602
        %v1035 = vpop.f32.mrb[0].mxu0
        %v1036 = vadd.f32 %v815, %v1035
        %v1037 = vpop.f32.mrb[0].mxu0
        %1038 = vmatprep.mubr.f32.mxu0 0.0
        %1039 = vmatmul.mubr.f32.gmra.mrb[0].mxu0 %v605
        %v1040 = vpop.f32.mrb[0].mxu0
        %v1041 = vadd.f32 %v820, %v1040
        %v1042 = vpop.f32.mrb[0].mxu0
        %1043 = vmatprep.mubr.f32.mxu0 0.0
        %1044 = vmatmul.mubr.f32.gmra.mrb[0].mxu0 %v608
        %v1045 = vpop.f32.mrb[0].mxu0
        %v1046 = vadd.f32 %v825, %v1045
        %v1047 = vpop.f32.mrb[0].mxu0
        %1048 = vmatprep.mubr.f32.mxu0 0.0
        %1049 = vmatmul.mubr.f32.gmra.mrb[0].mxu0 %v611
        %v1050 = vpop.f32.mrb[0].mxu0
        %v1051 = vadd.f32 %v830, %v1050
        %v1052 = vpop.f32.mrb[0].mxu0
        %1053 = vmatprep.mubr.f32.mxu0 0.0
        %1054 = vmatmul.mubr.f32.gmra.mrb[0].mxu0 %v614
        %v1055 = vpop.f32.mrb[0].mxu0
        %v1056 = vadd.f32 %v835, %v1055
        %v1057 = vpop.f32.mrb[0].mxu0
        %1058 = vdwg.mxu0
        %s1059 = scalar_lea.vmem %s1, 32
        %v1060 = vld [vmem:[%s1059] sm:$0xff]
        %v1061 = vld [vmem:[%s1059 + $0x8] sm:$0xf]
        %v1063 = vsel %vm528, %v522, 0
        %v1066 = vsel %vm619, %v1061, 0
        %1068 = vmatprep.subr.mxu0 0.0
        %1069 = vmatpush1.msra.mxu0 %v1060
        %1070 = vmatprep.subr.mxu0 0.0
        %1071 = vmatpush1.msra.mxu0 %v1066
        %1072 = vmatprep.subr.mxu0 0.0
        %1073 = vmatpush1.msra.mxu0 0.0
        %1074 = vmatprep.subr.mxu0 0.0
        %1075 = vmatpush1.msra.mxu0 0.0
        %1076 = vmatprep.subr.mxu0 0.0
        %1077 = vmatpush1.msra.mxu0 0.0
        %1078 = vmatprep.subr.mxu0 0.0
        %1079 = vmatpush1.msra.mxu0 0.0
        %1080 = vmatprep.subr.mxu0 0.0
        %1081 = vmatpush1.msra.mxu0 0.0
        %1082 = vmatprep.subr.mxu0 0.0
        %1083 = vmatpush1.msra.mxu0 0.0
        %1084 = vmatprep.subr.mxu0 0.0
        %1085 = vmatpush1.msra.mxu0 0.0
        %1086 = vmatprep.subr.mxu0 0.0
        %1087 = vmatpush1.msra.mxu0 0.0
        %1088 = vmatprep.subr.mxu0 0.0
        %1089 = vmatpush1.msra.mxu0 0.0
        %1090 = vmatprep.subr.mxu0 0.0
        %1091 = vmatpush1.msra.mxu0 0.0
        %1092 = vmatprep.subr.mxu0 0.0
        %1093 = vmatpush1.msra.mxu0 0.0
        %1094 = vmatprep.subr.mxu0 0.0
        %1095 = vmatpush1.msra.mxu0 0.0
        %1096 = vmatprep.subr.mxu0 0.0
        %1097 = vmatpush1.msra.mxu0 0.0
        %1098 = vmatprep.subr.mxu0 0.0
        %1099 = vmatpush1.msra.mxu0 0.0
        %1100 = vmatprep.subr.mxu0 0.0
        %1101 = vmatpush1.msra.mxu0 0.0
        %1102 = vmatprep.subr.mxu0 0.0
        %1103 = vmatpush1.msra.mxu0 0.0
        %1104 = vmatprep.subr.mxu0 0.0
        %1105 = vmatpush1.msra.mxu0 0.0
        %1106 = vmatprep.subr.mxu0 0.0
        %1107 = vmatpush1.msra.mxu0 0.0
        %1108 = vmatprep.subr.mxu0 0.0
        %1109 = vmatpush1.msra.mxu0 0.0
        %1110 = vmatprep.subr.mxu0 0.0
        %1111 = vmatpush1.msra.mxu0 0.0
        %1112 = vmatprep.subr.mxu0 0.0
        %1113 = vmatpush1.msra.mxu0 0.0
        %1114 = vmatprep.subr.mxu0 0.0
        %1115 = vmatpush1.msra.mxu0 0.0
        %1116 = vmatprep.subr.mxu0 0.0
        %1117 = vmatpush1.msra.mxu0 0.0
        %1118 = vmatprep.subr.mxu0 0.0
        %1119 = vmatpush1.msra.mxu0 0.0
        %1120 = vmatprep.subr.mxu0 0.0
        %1121 = vmatpush1.msra.mxu0 0.0
        %1122 = vmatprep.subr.mxu0 0.0
        %1123 = vmatpush1.msra.mxu0 0.0
        %1124 = vmatprep.subr.mxu0 0.0
        %1125 = vmatpush1.msra.mxu0 0.0
        %1126 = vmatprep.subr.mxu0 0.0
        %1127 = vmatpush1.msra.mxu0 0.0
        %1128 = vmatprep.subr.mxu0 0.0
        %1129 = vmatpush1.msra.mxu0 0.0
        %1130 = vmatprep.subr.mxu0 0.0
        %1131 = vmatpush1.msra.mxu0 0.0
        %1132 = vmatprep.mubr.f32.mxu0 0.0
        %1133 = vmatmul.mubr.f32.gmra.mrb[0].mxu0 %v533
        %v1134 = vpop.f32.mrb[0].mxu0
        %v1135 = vadd.f32 0.0, %v1134
        %v1136 = vpop.f32.mrb[0].mxu0
        %1137 = vmatprep.mubr.f32.mxu0 0.0
        %1138 = vmatmul.mubr.f32.gmra.mrb[0].mxu0 %v536
        %v1139 = vpop.f32.mrb[0].mxu0
        %v1140 = vadd.f32 0.0, %v1139
        %v1141 = vpop.f32.mrb[0].mxu0
        %1142 = vmatprep.mubr.f32.mxu0 0.0
        %1143 = vmatmul.mubr.f32.gmra.mrb[0].mxu0 %v539
        %v1144 = vpop.f32.mrb[0].mxu0
        %v1145 = vadd.f32 0.0, %v1144
        %v1146 = vpop.f32.mrb[0].mxu0
        %1147 = vmatprep.mubr.f32.mxu0 0.0
        %1148 = vmatmul.mubr.f32.gmra.mrb[0].mxu0 %v542
        %v1149 = vpop.f32.mrb[0].mxu0
        %v1150 = vadd.f32 0.0, %v1149
        %v1151 = vpop.f32.mrb[0].mxu0
        %1152 = vmatprep.mubr.f32.mxu0 0.0
        %1153 = vmatmul.mubr.f32.gmra.mrb[0].mxu0 %v545
        %v1154 = vpop.f32.mrb[0].mxu0
        %v1155 = vadd.f32 0.0, %v1154
        %v1156 = vpop.f32.mrb[0].mxu0
        %1157 = vmatprep.mubr.f32.mxu0 0.0
        %1158 = vmatmul.mubr.f32.gmra.mrb[0].mxu0 %v548
        %v1159 = vpop.f32.mrb[0].mxu0
        %v1160 = vadd.f32 0.0, %v1159
        %v1161 = vpop.f32.mrb[0].mxu0
        %1162 = vmatprep.mubr.f32.mxu0 0.0
        %1163 = vmatmul.mubr.f32.gmra.mrb[0].mxu0 %v551
        %v1164 = vpop.f32.mrb[0].mxu0
        %v1165 = vadd.f32 0.0, %v1164
        %v1166 = vpop.f32.mrb[0].mxu0
        %1167 = vmatprep.mubr.f32.mxu0 0.0
        %1168 = vmatmul.mubr.f32.gmra.mrb[0].mxu0 %v554
        %v1169 = vpop.f32.mrb[0].mxu0
        %v1170 = vadd.f32 0.0, %v1169
        %v1171 = vpop.f32.mrb[0].mxu0
        %1172 = vmatprep.mubr.f32.mxu0 0.0
        %1173 = vmatmul.mubr.f32.gmra.mrb[0].mxu0 %v557
        %v1174 = vpop.f32.mrb[0].mxu0
        %v1175 = vadd.f32 0.0, %v1174
        %v1176 = vpop.f32.mrb[0].mxu0
        %1177 = vmatprep.mubr.f32.mxu0 0.0
        %1178 = vmatmul.mubr.f32.gmra.mrb[0].mxu0 %v560
        %v1179 = vpop.f32.mrb[0].mxu0
        %v1180 = vadd.f32 0.0, %v1179
        %v1181 = vpop.f32.mrb[0].mxu0
        %1182 = vmatprep.mubr.f32.mxu0 0.0
        %1183 = vmatmul.mubr.f32.gmra.mrb[0].mxu0 %v563
        %v1184 = vpop.f32.mrb[0].mxu0
        %v1185 = vadd.f32 0.0, %v1184
        %v1186 = vpop.f32.mrb[0].mxu0
        %1187 = vmatprep.mubr.f32.mxu0 0.0
        %1188 = vmatmul.mubr.f32.gmra.mrb[0].mxu0 %v566
        %v1189 = vpop.f32.mrb[0].mxu0
        %v1190 = vadd.f32 0.0, %v1189
        %v1191 = vpop.f32.mrb[0].mxu0
        %1192 = vmatprep.mubr.f32.mxu0 0.0
        %1193 = vmatmul.mubr.f32.gmra.mrb[0].mxu0 %v569
        %v1194 = vpop.f32.mrb[0].mxu0
        %v1195 = vadd.f32 0.0, %v1194
        %v1196 = vpop.f32.mrb[0].mxu0
        %1197 = vmatprep.mubr.f32.mxu0 0.0
        %1198 = vmatmul.mubr.f32.gmra.mrb[0].mxu0 %v572
        %v1199 = vpop.f32.mrb[0].mxu0
        %v1200 = vadd.f32 0.0, %v1199
        %v1201 = vpop.f32.mrb[0].mxu0
        %1202 = vmatprep.mubr.f32.mxu0 0.0
        %1203 = vmatmul.mubr.f32.gmra.mrb[0].mxu0 %v575
        %v1204 = vpop.f32.mrb[0].mxu0
        %v1205 = vadd.f32 0.0, %v1204
        %v1206 = vpop.f32.mrb[0].mxu0
        %1207 = vmatprep.mubr.f32.mxu0 0.0
        %1208 = vmatmul.mubr.f32.gmra.mrb[0].mxu0 %v578
        %v1209 = vpop.f32.mrb[0].mxu0
        %v1210 = vadd.f32 0.0, %v1209
        %v1211 = vpop.f32.mrb[0].mxu0
        %1212 = vmatprep.mubr.f32.mxu0 0.0
        %1213 = vmatmul.mubr.f32.gmra.mrb[0].mxu0 %v581
        %v1214 = vpop.f32.mrb[0].mxu0
        %v1215 = vadd.f32 0.0, %v1214
        %v1216 = vpop.f32.mrb[0].mxu0
        %1217 = vmatprep.mubr.f32.mxu0 0.0
        %1218 = vmatmul.mubr.f32.gmra.mrb[0].mxu0 %v584
        %v1219 = vpop.f32.mrb[0].mxu0
        %v1220 = vadd.f32 0.0, %v1219
        %v1221 = vpop.f32.mrb[0].mxu0
        %1222 = vmatprep.mubr.f32.mxu0 0.0
        %1223 = vmatmul.mubr.f32.gmra.mrb[0].mxu0 %v587
        %v1224 = vpop.f32.mrb[0].mxu0
        %v1225 = vadd.f32 0.0, %v1224
        %v1226 = vpop.f32.mrb[0].mxu0
        %1227 = vmatprep.mubr.f32.mxu0 0.0
        %1228 = vmatmul.mubr.f32.gmra.mrb[0].mxu0 %v590
        %v1229 = vpop.f32.mrb[0].mxu0
        %v1230 = vadd.f32 0.0, %v1229
        %v1231 = vpop.f32.mrb[0].mxu0
        %1232 = vmatprep.mubr.f32.mxu0 0.0
        %1233 = vmatmul.mubr.f32.gmra.mrb[0].mxu0 %v593
        %v1234 = vpop.f32.mrb[0].mxu0
        %v1235 = vadd.f32 0.0, %v1234
        %v1236 = vpop.f32.mrb[0].mxu0
        %1237 = vmatprep.mubr.f32.mxu0 0.0
        %1238 = vmatmul.mubr.f32.gmra.mrb[0].mxu0 %v596
        %v1239 = vpop.f32.mrb[0].mxu0
        %v1240 = vadd.f32 0.0, %v1239
        %v1241 = vpop.f32.mrb[0].mxu0
        %1242 = vmatprep.mubr.f32.mxu0 0.0
        %1243 = vmatmul.mubr.f32.gmra.mrb[0].mxu0 %v599
        %v1244 = vpop.f32.mrb[0].mxu0
        %v1245 = vadd.f32 0.0, %v1244
        %v1246 = vpop.f32.mrb[0].mxu0
        %1247 = vmatprep.mubr.f32.mxu0 0.0
        %1248 = vmatmul.mubr.f32.gmra.mrb[0].mxu0 %v602
        %v1249 = vpop.f32.mrb[0].mxu0
        %v1250 = vadd.f32 0.0, %v1249
        %v1251 = vpop.f32.mrb[0].mxu0
        %1252 = vmatprep.mubr.f32.mxu0 0.0
        %1253 = vmatmul.mubr.f32.gmra.mrb[0].mxu0 %v605
        %v1254 = vpop.f32.mrb[0].mxu0
        %v1255 = vadd.f32 0.0, %v1254
        %v1256 = vpop.f32.mrb[0].mxu0
        %1257 = vmatprep.mubr.f32.mxu0 0.0
        %1258 = vmatmul.mubr.f32.gmra.mrb[0].mxu0 %v608
        %v1259 = vpop.f32.mrb[0].mxu0
        %v1260 = vadd.f32 0.0, %v1259
        %v1261 = vpop.f32.mrb[0].mxu0
        %1262 = vmatprep.mubr.f32.mxu0 0.0
        %1263 = vmatmul.mubr.f32.gmra.mrb[0].mxu0 %v611
        %v1264 = vpop.f32.mrb[0].mxu0
        %v1265 = vadd.f32 0.0, %v1264
        %v1266 = vpop.f32.mrb[0].mxu0
        %1267 = vmatprep.mubr.f32.mxu0 0.0
        %1268 = vmatmul.mubr.f32.gmra.mrb[0].mxu0 %v614
        %v1269 = vpop.f32.mrb[0].mxu0
        %v1270 = vadd.f32 0.0, %v1269
        %v1271 = vpop.f32.mrb[0].mxu0
        %1272 = vmatprep.mubr.f32.mxu0 0.0
        %1273 = vmatmul.mubr.f32.gmra.mrb[0].mxu0 %v617
        %v1274 = vpop.f32.mrb[0].mxu0
        %v1275 = vadd.f32 0.0, %v1274
        %v1276 = vpop.f32.mrb[0].mxu0
        %1277 = vmatprep.mubr.f32.mxu0 0.0
        %1278 = vmatmul.mubr.f32.gmra.mrb[0].mxu0 %v1063
        %v1279 = vpop.f32.mrb[0].mxu0
        %v1280 = vadd.f32 0.0, %v1279
        %v1281 = vpop.f32.mrb[0].mxu0
        %1282 = vdwg.mxu0
        %v1283 = vadd.f32 %v911, %v1135
        %v1284 = vadd.f32 %v916, %v1140
        %v1285 = vadd.f32 %v921, %v1145
        %v1286 = vadd.f32 %v926, %v1150
        %v1287 = vadd.f32 %v931, %v1155
        %v1288 = vadd.f32 %v936, %v1160
        %v1289 = vadd.f32 %v941, %v1165
        %v1290 = vadd.f32 %v946, %v1170
        %v1291 = vadd.f32 %v951, %v1175
        %v1292 = vadd.f32 %v956, %v1180
        %v1293 = vadd.f32 %v961, %v1185
        %v1294 = vadd.f32 %v966, %v1190
        %v1295 = vadd.f32 %v971, %v1195
        %v1296 = vadd.f32 %v976, %v1200
        %v1297 = vadd.f32 %v981, %v1205
        %v1298 = vadd.f32 %v986, %v1210
        %v1299 = vadd.f32 %v991, %v1215
        %v1300 = vadd.f32 %v996, %v1220
        %v1301 = vadd.f32 %v1001, %v1225
        %v1302 = vadd.f32 %v1006, %v1230
        %v1303 = vadd.f32 %v1011, %v1235
        %v1304 = vadd.f32 %v1016, %v1240
        %v1305 = vadd.f32 %v1021, %v1245
        %v1306 = vadd.f32 %v1026, %v1250
        %v1307 = vadd.f32 %v1031, %v1255
        %v1308 = vadd.f32 %v1036, %v1260
        %v1309 = vadd.f32 %v1041, %v1265
        %v1310 = vadd.f32 %v1046, %v1270
        %v1311 = vadd.f32 %v1051, %v1275
        %v1312 = vadd.f32 %v1056, %v1280
        %v1313 = vld [vmem:[%s2] sm:$0x1]
        %v1314 = vlaneseq
        %v1315 = vshrl.u32 %v1314, 7
        %v1316 = vsub.s32 0, %v1315
        %v1317 = vrot.slane %v1313, %v1316
        %v1318 = vmul.f32 %v1283, %v1317
        %v1319 = vmul.f32 %v1284, %v1317
        %v1320 = vmul.f32 %v1285, %v1317
        %v1321 = vmul.f32 %v1286, %v1317
        %v1322 = vmul.f32 %v1287, %v1317
        %v1323 = vmul.f32 %v1288, %v1317
        %v1324 = vmul.f32 %v1289, %v1317
        %v1325 = vmul.f32 %v1290, %v1317
        %v1326 = vmul.f32 %v1291, %v1317
        %v1327 = vmul.f32 %v1292, %v1317
        %v1328 = vmul.f32 %v1293, %v1317
        %v1329 = vmul.f32 %v1294, %v1317
        %v1330 = vmul.f32 %v1295, %v1317
        %v1331 = vmul.f32 %v1296, %v1317
        %v1332 = vmul.f32 %v1297, %v1317
        %v1333 = vmul.f32 %v1298, %v1317
        %v1334 = vmul.f32 %v1299, %v1317
        %v1335 = vmul.f32 %v1300, %v1317
        %v1336 = vmul.f32 %v1301, %v1317
        %v1337 = vmul.f32 %v1302, %v1317
        %v1338 = vmul.f32 %v1303, %v1317
        %v1339 = vmul.f32 %v1304, %v1317
        %v1340 = vmul.f32 %v1305, %v1317
        %v1341 = vmul.f32 %v1306, %v1317
        %v1342 = vmul.f32 %v1307, %v1317
        %v1343 = vmul.f32 %v1308, %v1317
        %v1344 = vmul.f32 %v1309, %v1317
        %v1345 = vmul.f32 %v1310, %v1317
        %v1346 = vmul.f32 %v1311, %v1317
        %v1347 = vmul.f32 %v1312, %v1317
        %v1348 = vld [vmem:[%s2 + $0x1] sm:$0x1]
        %v1349 = vlaneseq
        %v1350 = vshrl.u32 %v1349, 7
        %v1351 = vsub.s32 0, %v1350
        %v1352 = vrot.slane %v1348, %v1351
        %v1353 = vadd.f32 %v1318, %v1352
        %v1354 = vadd.f32 %v1319, %v1352
        %v1355 = vadd.f32 %v1320, %v1352
        %v1356 = vadd.f32 %v1321, %v1352
        %v1357 = vadd.f32 %v1322, %v1352
        %v1358 = vadd.f32 %v1323, %v1352
        %v1359 = vadd.f32 %v1324, %v1352
        %v1360 = vadd.f32 %v1325, %v1352
        %v1361 = vadd.f32 %v1326, %v1352
        %v1362 = vadd.f32 %v1327, %v1352
        %v1363 = vadd.f32 %v1328, %v1352
        %v1364 = vadd.f32 %v1329, %v1352
        %v1365 = vadd.f32 %v1330, %v1352
        %v1366 = vadd.f32 %v1331, %v1352
        %v1367 = vadd.f32 %v1332, %v1352
        %v1368 = vadd.f32 %v1333, %v1352
        %v1369 = vadd.f32 %v1334, %v1352
        %v1370 = vadd.f32 %v1335, %v1352
        %v1371 = vadd.f32 %v1336, %v1352
        %v1372 = vadd.f32 %v1337, %v1352
        %v1373 = vadd.f32 %v1338, %v1352
        %v1374 = vadd.f32 %v1339, %v1352
        %v1375 = vadd.f32 %v1340, %v1352
        %v1376 = vadd.f32 %v1341, %v1352
        %v1377 = vadd.f32 %v1342, %v1352
        %v1378 = vadd.f32 %v1343, %v1352
        %v1379 = vadd.f32 %v1344, %v1352
        %v1380 = vadd.f32 %v1345, %v1352
        %v1381 = vadd.f32 %v1346, %v1352
        %v1382 = vadd.f32 %v1347, %v1352
        %v1383 = vmax.f32 %v1353, 0.0
        %v1384 = vmax.f32 %v1354, 0.0
        %v1385 = vmax.f32 %v1355, 0.0
        %v1386 = vmax.f32 %v1356, 0.0
        %v1387 = vmax.f32 %v1357, 0.0
        %v1388 = vmax.f32 %v1358, 0.0
        %v1389 = vmax.f32 %v1359, 0.0
        %v1390 = vmax.f32 %v1360, 0.0
        %v1391 = vmax.f32 %v1361, 0.0
        %v1392 = vmax.f32 %v1362, 0.0
        %v1393 = vmax.f32 %v1363, 0.0
        %v1394 = vmax.f32 %v1364, 0.0
        %v1395 = vmax.f32 %v1365, 0.0
        %v1396 = vmax.f32 %v1366, 0.0
        %v1397 = vmax.f32 %v1367, 0.0
        %v1398 = vmax.f32 %v1368, 0.0
        %v1399 = vmax.f32 %v1369, 0.0
        %v1400 = vmax.f32 %v1370, 0.0
        %v1401 = vmax.f32 %v1371, 0.0
        %v1402 = vmax.f32 %v1372, 0.0
        %v1403 = vmax.f32 %v1373, 0.0
        %v1404 = vmax.f32 %v1374, 0.0
        %v1405 = vmax.f32 %v1375, 0.0
        %v1406 = vmax.f32 %v1376, 0.0
        %v1407 = vmax.f32 %v1377, 0.0
        %v1408 = vmax.f32 %v1378, 0.0
        %v1409 = vmax.f32 %v1379, 0.0
        %v1410 = vmax.f32 %v1380, 0.0
        %v1411 = vmax.f32 %v1381, 0.0
        %v1412 = vmax.f32 %v1382, 0.0
        %v1413 = vmax.f32 %v1383, %v1384
        %v1414 = vmax.f32 %v1385, %v1386
        %v1415 = vmax.f32 %v1387, %v1388
        %v1416 = vmax.f32 %v1389, %v1390
        %v1417 = vmax.f32 %v1391, %v1392
        %v1418 = vmax.f32 %v1393, %v1394
        %v1419 = vmax.f32 %v1395, %v1396
        %v1420 = vmax.f32 %v1397, %v1398
        %v1421 = vmax.f32 %v1399, %v1400
        %v1422 = vmax.f32 %v1401, %v1402
        %v1423 = vmax.f32 %v1403, %v1404
        %v1424 = vmax.f32 %v1405, %v1406
        %v1425 = vmax.f32 %v1407, %v1408
        %v1426 = vmax.f32 %v1409, %v1410
        %v1427 = vmax.f32 %v1411, %v1412
        %v1428 = vld [vmem:[%s3] sm:$0xff]
        %v1429 = vld [vmem:[%s3 + $0x8] sm:$0xff]
        %v1430 = vld [vmem:[%s3 + $0x10] sm:$0xff]
        %v1431 = vld [vmem:[%s3 + $0x18] sm:$0xff]
        %s1432 = scalar_lea.vmem %s3, 32
        %v1433 = vld [vmem:[%s1432] sm:$0xff]
        %v1434 = vld [vmem:[%s1432 + $0x8] sm:$0xff]
        %v1435 = vld [vmem:[%s1432 + $0x10] sm:$0xff]
        %v1436 = vld [vmem:[%s1432 + $0x18] sm:$0xff]
        %vm1437 = vcmask 261120
        %v1439 = vsel %vm1437, %v1414, 0
        %v1442 = vsel %vm1437, %v1415, 0
        %v1445 = vsel %vm1437, %v1416, 0
        %v1448 = vsel %vm1437, %v1417, 0
        %v1451 = vsel %vm1437, %v1418, 0
        %v1454 = vsel %vm1437, %v1419, 0
        %v1457 = vsel %vm1437, %v1420, 0
        %v1460 = vsel %vm1437, %v1421, 0
        %v1463 = vsel %vm1437, %v1422, 0
        %v1466 = vsel %vm1437, %v1423, 0
        %v1469 = vsel %vm1437, %v1424, 0
        %v1472 = vsel %vm1437, %v1425, 0
        %v1475 = vsel %vm1437, %v1426, 0
        %1477 = vmatprep.subr.mxu0 0.0
        %1478 = vmatpush1.msra.mxu0 %v1433
        %1479 = vmatprep.subr.mxu0 0.0
        %1480 = vmatpush1.msra.mxu0 %v1434
        %1481 = vmatprep.subr.mxu0 0.0
        %1482 = vmatpush1.msra.mxu0 %v1435
        %1483 = vmatprep.subr.mxu0 0.0
        %1484 = vmatpush1.msra.mxu0 %v1436
        %1485 = vmatprep.subr.mxu0 0.0
        %1486 = vmatpush1.msra.mxu0 0.0
        %1487 = vmatprep.subr.mxu0 0.0
        %1488 = vmatpush1.msra.mxu0 0.0
        %1489 = vmatprep.subr.mxu0 0.0
        %1490 = vmatpush1.msra.mxu0 0.0
        %1491 = vmatprep.subr.mxu0 0.0
        %1492 = vmatpush1.msra.mxu0 0.0
        %1493 = vmatprep.subr.mxu0 0.0
        %1494 = vmatpush1.msra.mxu0 0.0
        %1495 = vmatprep.subr.mxu0 0.0
        %1496 = vmatpush1.msra.mxu0 0.0
        %1497 = vmatprep.subr.mxu0 0.0
        %1498 = vmatpush1.msra.mxu0 0.0
        %1499 = vmatprep.subr.mxu0 0.0
        %1500 = vmatpush1.msra.mxu0 0.0
        %1501 = vmatprep.subr.mxu0 0.0
        %1502 = vmatpush1.msra.mxu0 0.0
        %1503 = vmatprep.subr.mxu0 0.0
        %1504 = vmatpush1.msra.mxu0 0.0
        %1505 = vmatprep.subr.mxu0 0.0
        %1506 = vmatpush1.msra.mxu0 0.0
        %1507 = vmatprep.subr.mxu0 0.0
        %1508 = vmatpush1.msra.mxu0 0.0
        %1509 = vmatprep.subr.mxu0 0.0
        %1510 = vmatpush1.msra.mxu0 0.0
        %1511 = vmatprep.subr.mxu0 0.0
        %1512 = vmatpush1.msra.mxu0 0.0
        %1513 = vmatprep.subr.mxu0 0.0
        %1514 = vmatpush1.msra.mxu0 0.0
        %1515 = vmatprep.subr.mxu0 0.0
        %1516 = vmatpush1.msra.mxu0 0.0
        %1517 = vmatprep.subr.mxu0 0.0
        %1518 = vmatpush1.msra.mxu0 0.0
        %1519 = vmatprep.subr.mxu0 0.0
        %1520 = vmatpush1.msra.mxu0 0.0
        %1521 = vmatprep.subr.mxu0 0.0
        %1522 = vmatpush1.msra.mxu0 0.0
        %1523 = vmatprep.subr.mxu0 0.0
        %1524 = vmatpush1.msra.mxu0 0.0
        %1525 = vmatprep.subr.mxu0 0.0
        %1526 = vmatpush1.msra.mxu0 0.0
        %1527 = vmatprep.subr.mxu0 0.0
        %1528 = vmatpush1.msra.mxu0 0.0
        %1529 = vmatprep.subr.mxu0 0.0
        %1530 = vmatpush1.msra.mxu0 0.0
        %1531 = vmatprep.subr.mxu0 0.0
        %1532 = vmatpush1.msra.mxu0 0.0
        %1533 = vmatprep.subr.mxu0 0.0
        %1534 = vmatpush1.msra.mxu0 0.0
        %1535 = vmatprep.subr.mxu0 0.0
        %1536 = vmatpush1.msra.mxu0 0.0
        %1537 = vmatprep.subr.mxu0 0.0
        %1538 = vmatpush1.msra.mxu0 0.0
        %1539 = vmatprep.subr.mxu0 0.0
        %1540 = vmatpush1.msra.mxu0 0.0
        %1541 = vmatprep.mubr.f32.mxu0 0.0
        %1542 = vmatmul.mubr.f32.gmra.mrb[0].mxu0 %v1439
        %v1543 = vpop.f32.mrb[0].mxu0
        %v1544 = vadd.f32 0.0, %v1543
        %v1545 = vpop.f32.mrb[0].mxu0
        %1546 = vmatprep.mubr.f32.mxu0 0.0
        %1547 = vmatmul.mubr.f32.gmra.mrb[0].mxu0 %v1442
        %v1548 = vpop.f32.mrb[0].mxu0
        %v1549 = vadd.f32 0.0, %v1548
        %v1550 = vpop.f32.mrb[0].mxu0
        %1551 = vmatprep.mubr.f32.mxu0 0.0
        %1552 = vmatmul.mubr.f32.gmra.mrb[0].mxu0 %v1445
        %v1553 = vpop.f32.mrb[0].mxu0
        %v1554 = vadd.f32 0.0, %v1553
        %v1555 = vpop.f32.mrb[0].mxu0
        %1556 = vmatprep.mubr.f32.mxu0 0.0
        %1557 = vmatmul.mubr.f32.gmra.mrb[0].mxu0 %v1448
        %v1558 = vpop.f32.mrb[0].mxu0
        %v1559 = vadd.f32 0.0, %v1558
        %v1560 = vpop.f32.mrb[0].mxu0
        %1561 = vmatprep.mubr.f32.mxu0 0.0
        %1562 = vmatmul.mubr.f32.gmra.mrb[0].mxu0 %v1451
        %v1563 = vpop.f32.mrb[0].mxu0
        %v1564 = vadd.f32 0.0, %v1563
        %v1565 = vpop.f32.mrb[0].mxu0
        %1566 = vmatprep.mubr.f32.mxu0 0.0
        %1567 = vmatmul.mubr.f32.gmra.mrb[0].mxu0 %v1454
        %v1568 = vpop.f32.mrb[0].mxu0
        %v1569 = vadd.f32 0.0, %v1568
        %v1570 = vpop.f32.mrb[0].mxu0
        %1571 = vmatprep.mubr.f32.mxu0 0.0
        %1572 = vmatmul.mubr.f32.gmra.mrb[0].mxu0 %v1457
        %v1573 = vpop.f32.mrb[0].mxu0
        %v1574 = vadd.f32 0.0, %v1573
        %v1575 = vpop.f32.mrb[0].mxu0
        %1576 = vmatprep.mubr.f32.mxu0 0.0
        %1577 = vmatmul.mubr.f32.gmra.mrb[0].mxu0 %v1460
        %v1578 = vpop.f32.mrb[0].mxu0
        %v1579 = vadd.f32 0.0, %v1578
        %v1580 = vpop.f32.mrb[0].mxu0
        %1581 = vmatprep.mubr.f32.mxu0 0.0
        %1582 = vmatmul.mubr.f32.gmra.mrb[0].mxu0 %v1463
        %v1583 = vpop.f32.mrb[0].mxu0
        %v1584 = vadd.f32 0.0, %v1583
        %v1585 = vpop.f32.mrb[0].mxu0
        %1586 = vmatprep.mubr.f32.mxu0 0.0
        %1587 = vmatmul.mubr.f32.gmra.mrb[0].mxu0 %v1466
        %v1588 = vpop.f32.mrb[0].mxu0
        %v1589 = vadd.f32 0.0, %v1588
        %v1590 = vpop.f32.mrb[0].mxu0
        %1591 = vmatprep.mubr.f32.mxu0 0.0
        %1592 = vmatmul.mubr.f32.gmra.mrb[0].mxu0 %v1469
        %v1593 = vpop.f32.mrb[0].mxu0
        %v1594 = vadd.f32 0.0, %v1593
        %v1595 = vpop.f32.mrb[0].mxu0
        %1596 = vmatprep.mubr.f32.mxu0 0.0
        %1597 = vmatmul.mubr.f32.gmra.mrb[0].mxu0 %v1472
        %v1598 = vpop.f32.mrb[0].mxu0
        %v1599 = vadd.f32 0.0, %v1598
        %v1600 = vpop.f32.mrb[0].mxu0
        %1601 = vmatprep.mubr.f32.mxu0 0.0
        %1602 = vmatmul.mubr.f32.gmra.mrb[0].mxu0 %v1475
        %v1603 = vpop.f32.mrb[0].mxu0
        %v1604 = vpop.f32.mrb[0].mxu0
        %1605 = vdwg.mxu0
        %v1607 = vsel %vm1437, %v1413, 0
        %1609 = vmatprep.subr.mxu0 0.0
        %1610 = vmatpush1.msra.mxu0 %v1428
        %1611 = vmatprep.subr.mxu0 0.0
        %1612 = vmatpush1.msra.mxu0 %v1429
        %1613 = vmatprep.subr.mxu0 0.0
        %1614 = vmatpush1.msra.mxu0 %v1430
        %1615 = vmatprep.subr.mxu0 0.0
        %1616 = vmatpush1.msra.mxu0 %v1431
        %1617 = vmatprep.subr.mxu0 0.0
        %1618 = vmatpush1.msra.mxu0 0.0
        %1619 = vmatprep.subr.mxu0 0.0
        %1620 = vmatpush1.msra.mxu0 0.0
        %1621 = vmatprep.subr.mxu0 0.0
        %1622 = vmatpush1.msra.mxu0 0.0
        %1623 = vmatprep.subr.mxu0 0.0
        %1624 = vmatpush1.msra.mxu0 0.0
        %1625 = vmatprep.subr.mxu0 0.0
        %1626 = vmatpush1.msra.mxu0 0.0
        %1627 = vmatprep.subr.mxu0 0.0
        %1628 = vmatpush1.msra.mxu0 0.0
        %1629 = vmatprep.subr.mxu0 0.0
        %1630 = vmatpush1.msra.mxu0 0.0
        %1631 = vmatprep.subr.mxu0 0.0
        %1632 = vmatpush1.msra.mxu0 0.0
        %1633 = vmatprep.subr.mxu0 0.0
        %1634 = vmatpush1.msra.mxu0 0.0
        %1635 = vmatprep.subr.mxu0 0.0
        %1636 = vmatpush1.msra.mxu0 0.0
        %1637 = vmatprep.subr.mxu0 0.0
        %1638 = vmatpush1.msra.mxu0 0.0
        %1639 = vmatprep.subr.mxu0 0.0
        %1640 = vmatpush1.msra.mxu0 0.0
        %1641 = vmatprep.subr.mxu0 0.0
        %1642 = vmatpush1.msra.mxu0 0.0
        %1643 = vmatprep.subr.mxu0 0.0
        %1644 = vmatpush1.msra.mxu0 0.0
        %1645 = vmatprep.subr.mxu0 0.0
        %1646 = vmatpush1.msra.mxu0 0.0
        %1647 = vmatprep.subr.mxu0 0.0
        %1648 = vmatpush1.msra.mxu0 0.0
        %1649 = vmatprep.subr.mxu0 0.0
        %1650 = vmatpush1.msra.mxu0 0.0
        %1651 = vmatprep.subr.mxu0 0.0
        %1652 = vmatpush1.msra.mxu0 0.0
        %1653 = vmatprep.subr.mxu0 0.0
        %1654 = vmatpush1.msra.mxu0 0.0
        %1655 = vmatprep.subr.mxu0 0.0
        %1656 = vmatpush1.msra.mxu0 0.0
        %1657 = vmatprep.subr.mxu0 0.0
        %1658 = vmatpush1.msra.mxu0 0.0
        %1659 = vmatprep.subr.mxu0 0.0
        %1660 = vmatpush1.msra.mxu0 0.0
        %1661 = vmatprep.subr.mxu0 0.0
        %1662 = vmatpush1.msra.mxu0 0.0
        %1663 = vmatprep.subr.mxu0 0.0
        %1664 = vmatpush1.msra.mxu0 0.0
        %1665 = vmatprep.subr.mxu0 0.0
        %1666 = vmatpush1.msra.mxu0 0.0
        %1667 = vmatprep.subr.mxu0 0.0
        %1668 = vmatpush1.msra.mxu0 0.0
        %1669 = vmatprep.subr.mxu0 0.0
        %1670 = vmatpush1.msra.mxu0 0.0
        %1671 = vmatprep.subr.mxu0 0.0
        %1672 = vmatpush1.msra.mxu0 0.0
        %1673 = vmatprep.mubr.f32.mxu0 0.0
        %1674 = vmatmul.mubr.f32.gmra.mrb[0].mxu0 %v1607
        %v1675 = vpop.f32.mrb[0].mxu0
        %v1676 = vadd.f32 %v1544, %v1675
        %v1677 = vpop.f32.mrb[0].mxu0
        %1678 = vmatprep.mubr.f32.mxu0 0.0
        %1679 = vmatmul.mubr.f32.gmra.mrb[0].mxu0 %v1439
        %v1680 = vpop.f32.mrb[0].mxu0
        %v1681 = vadd.f32 %v1549, %v1680
        %v1682 = vpop.f32.mrb[0].mxu0
        %1683 = vmatprep.mubr.f32.mxu0 0.0
        %1684 = vmatmul.mubr.f32.gmra.mrb[0].mxu0 %v1442
        %v1685 = vpop.f32.mrb[0].mxu0
        %v1686 = vadd.f32 %v1554, %v1685
        %v1687 = vpop.f32.mrb[0].mxu0
        %1688 = vmatprep.mubr.f32.mxu0 0.0
        %1689 = vmatmul.mubr.f32.gmra.mrb[0].mxu0 %v1445
        %v1690 = vpop.f32.mrb[0].mxu0
        %v1691 = vadd.f32 %v1559, %v1690
        %v1692 = vpop.f32.mrb[0].mxu0
        %1693 = vmatprep.mubr.f32.mxu0 0.0
        %1694 = vmatmul.mubr.f32.gmra.mrb[0].mxu0 %v1448
        %v1695 = vpop.f32.mrb[0].mxu0
        %v1696 = vadd.f32 %v1564, %v1695
        %v1697 = vpop.f32.mrb[0].mxu0
        %1698 = vmatprep.mubr.f32.mxu0 0.0
        %1699 = vmatmul.mubr.f32.gmra.mrb[0].mxu0 %v1451
        %v1700 = vpop.f32.mrb[0].mxu0
        %v1701 = vadd.f32 %v1569, %v1700
        %v1702 = vpop.f32.mrb[0].mxu0
        %1703 = vmatprep.mubr.f32.mxu0 0.0
        %1704 = vmatmul.mubr.f32.gmra.mrb[0].mxu0 %v1454
        %v1705 = vpop.f32.mrb[0].mxu0
        %v1706 = vadd.f32 %v1574, %v1705
        %v1707 = vpop.f32.mrb[0].mxu0
        %1708 = vmatprep.mubr.f32.mxu0 0.0
        %1709 = vmatmul.mubr.f32.gmra.mrb[0].mxu0 %v1457
        %v1710 = vpop.f32.mrb[0].mxu0
        %v1711 = vadd.f32 %v1579, %v1710
        %v1712 = vpop.f32.mrb[0].mxu0
        %1713 = vmatprep.mubr.f32.mxu0 0.0
        %1714 = vmatmul.mubr.f32.gmra.mrb[0].mxu0 %v1460
        %v1715 = vpop.f32.mrb[0].mxu0
        %v1716 = vadd.f32 %v1584, %v1715
        %v1717 = vpop.f32.mrb[0].mxu0
        %1718 = vmatprep.mubr.f32.mxu0 0.0
        %1719 = vmatmul.mubr.f32.gmra.mrb[0].mxu0 %v1463
        %v1720 = vpop.f32.mrb[0].mxu0
        %v1721 = vadd.f32 %v1589, %v1720
        %v1722 = vpop.f32.mrb[0].mxu0
        %1723 = vmatprep.mubr.f32.mxu0 0.0
        %1724 = vmatmul.mubr.f32.gmra.mrb[0].mxu0 %v1466
        %v1725 = vpop.f32.mrb[0].mxu0
        %v1726 = vadd.f32 %v1594, %v1725
        %v1727 = vpop.f32.mrb[0].mxu0
        %1728 = vmatprep.mubr.f32.mxu0 0.0
        %1729 = vmatmul.mubr.f32.gmra.mrb[0].mxu0 %v1469
        %v1730 = vpop.f32.mrb[0].mxu0
        %v1731 = vadd.f32 %v1599, %v1730
        %v1732 = vpop.f32.mrb[0].mxu0
        %1733 = vmatprep.mubr.f32.mxu0 0.0
        %1734 = vmatmul.mubr.f32.gmra.mrb[0].mxu0 %v1472
        %v1735 = vpop.f32.mrb[0].mxu0
        %v1736 = vpop.f32.mrb[0].mxu0
        %1737 = vdwg.mxu0
        %s1738 = scalar_lea.vmem %s3, 64
        %v1739 = vld [vmem:[%s1738] sm:$0xff]
        %v1740 = vld [vmem:[%s1738 + $0x8] sm:$0xff]
        %v1741 = vld [vmem:[%s1738 + $0x10] sm:$0xff]
        %v1742 = vld [vmem:[%s1738 + $0x18] sm:$0xff]
        %v1744 = vsel %vm1437, %v1427, 0
        %1746 = vmatprep.subr.mxu0 0.0
        %1747 = vmatpush1.msra.mxu0 %v1739
        %1748 = vmatprep.subr.mxu0 0.0
        %1749 = vmatpush1.msra.mxu0 %v1740
        %1750 = vmatprep.subr.mxu0 0.0
        %1751 = vmatpush1.msra.mxu0 %v1741
        %1752 = vmatprep.subr.mxu0 0.0
        %1753 = vmatpush1.msra.mxu0 %v1742
        %1754 = vmatprep.subr.mxu0 0.0
        %1755 = vmatpush1.msra.mxu0 0.0
        %1756 = vmatprep.subr.mxu0 0.0
        %1757 = vmatpush1.msra.mxu0 0.0
        %1758 = vmatprep.subr.mxu0 0.0
        %1759 = vmatpush1.msra.mxu0 0.0
        %1760 = vmatprep.subr.mxu0 0.0
        %1761 = vmatpush1.msra.mxu0 0.0
        %1762 = vmatprep.subr.mxu0 0.0
        %1763 = vmatpush1.msra.mxu0 0.0
        %1764 = vmatprep.subr.mxu0 0.0
        %1765 = vmatpush1.msra.mxu0 0.0
        %1766 = vmatprep.subr.mxu0 0.0
        %1767 = vmatpush1.msra.mxu0 0.0
        %1768 = vmatprep.subr.mxu0 0.0
        %1769 = vmatpush1.msra.mxu0 0.0
        %1770 = vmatprep.subr.mxu0 0.0
        %1771 = vmatpush1.msra.mxu0 0.0
        %1772 = vmatprep.subr.mxu0 0.0
        %1773 = vmatpush1.msra.mxu0 0.0
        %1774 = vmatprep.subr.mxu0 0.0
        %1775 = vmatpush1.msra.mxu0 0.0
        %1776 = vmatprep.subr.mxu0 0.0
        %1777 = vmatpush1.msra.mxu0 0.0
        %1778 = vmatprep.subr.mxu0 0.0
        %1779 = vmatpush1.msra.mxu0 0.0
        %1780 = vmatprep.subr.mxu0 0.0
        %1781 = vmatpush1.msra.mxu0 0.0
        %1782 = vmatprep.subr.mxu0 0.0
        %1783 = vmatpush1.msra.mxu0 0.0
        %1784 = vmatprep.subr.mxu0 0.0
        %1785 = vmatpush1.msra.mxu0 0.0
        %1786 = vmatprep.subr.mxu0 0.0
        %1787 = vmatpush1.msra.mxu0 0.0
        %1788 = vmatprep.subr.mxu0 0.0
        %1789 = vmatpush1.msra.mxu0 0.0
        %1790 = vmatprep.subr.mxu0 0.0
        %1791 = vmatpush1.msra.mxu0 0.0
        %1792 = vmatprep.subr.mxu0 0.0
        %1793 = vmatpush1.msra.mxu0 0.0
        %1794 = vmatprep.subr.mxu0 0.0
        %1795 = vmatpush1.msra.mxu0 0.0
        %1796 = vmatprep.subr.mxu0 0.0
        %1797 = vmatpush1.msra.mxu0 0.0
        %1798 = vmatprep.subr.mxu0 0.0
        %1799 = vmatpush1.msra.mxu0 0.0
        %1800 = vmatprep.subr.mxu0 0.0
        %1801 = vmatpush1.msra.mxu0 0.0
        %1802 = vmatprep.subr.mxu0 0.0
        %1803 = vmatpush1.msra.mxu0 0.0
        %1804 = vmatprep.subr.mxu0 0.0
        %1805 = vmatpush1.msra.mxu0 0.0
        %1806 = vmatprep.subr.mxu0 0.0
        %1807 = vmatpush1.msra.mxu0 0.0
        %1808 = vmatprep.subr.mxu0 0.0
        %1809 = vmatpush1.msra.mxu0 0.0
        %1810 = vmatprep.mubr.f32.mxu0 0.0
        %1811 = vmatmul.mubr.f32.gmra.mrb[0].mxu0 %v1442
        %v1812 = vpop.f32.mrb[0].mxu0
        %v1813 = vadd.f32 0.0, %v1812
        %v1814 = vpop.f32.mrb[0].mxu0
        %1815 = vmatprep.mubr.f32.mxu0 0.0
        %1816 = vmatmul.mubr.f32.gmra.mrb[0].mxu0 %v1445
        %v1817 = vpop.f32.mrb[0].mxu0
        %v1818 = vadd.f32 0.0, %v1817
        %v1819 = vpop.f32.mrb[0].mxu0
        %1820 = vmatprep.mubr.f32.mxu0 0.0
        %1821 = vmatmul.mubr.f32.gmra.mrb[0].mxu0 %v1448
        %v1822 = vpop.f32.mrb[0].mxu0
        %v1823 = vadd.f32 0.0, %v1822
        %v1824 = vpop.f32.mrb[0].mxu0
        %1825 = vmatprep.mubr.f32.mxu0 0.0
        %1826 = vmatmul.mubr.f32.gmra.mrb[0].mxu0 %v1451
        %v1827 = vpop.f32.mrb[0].mxu0
        %v1828 = vadd.f32 0.0, %v1827
        %v1829 = vpop.f32.mrb[0].mxu0
        %1830 = vmatprep.mubr.f32.mxu0 0.0
        %1831 = vmatmul.mubr.f32.gmra.mrb[0].mxu0 %v1454
        %v1832 = vpop.f32.mrb[0].mxu0
        %v1833 = vadd.f32 0.0, %v1832
        %v1834 = vpop.f32.mrb[0].mxu0
        %1835 = vmatprep.mubr.f32.mxu0 0.0
        %1836 = vmatmul.mubr.f32.gmra.mrb[0].mxu0 %v1457
        %v1837 = vpop.f32.mrb[0].mxu0
        %v1838 = vadd.f32 0.0, %v1837
        %v1839 = vpop.f32.mrb[0].mxu0
        %1840 = vmatprep.mubr.f32.mxu0 0.0
        %1841 = vmatmul.mubr.f32.gmra.mrb[0].mxu0 %v1460
        %v1842 = vpop.f32.mrb[0].mxu0
        %v1843 = vadd.f32 0.0, %v1842
        %v1844 = vpop.f32.mrb[0].mxu0
        %1845 = vmatprep.mubr.f32.mxu0 0.0
        %1846 = vmatmul.mubr.f32.gmra.mrb[0].mxu0 %v1463
        %v1847 = vpop.f32.mrb[0].mxu0
        %v1848 = vadd.f32 0.0, %v1847
        %v1849 = vpop.f32.mrb[0].mxu0
        %1850 = vmatprep.mubr.f32.mxu0 0.0
        %1851 = vmatmul.mubr.f32.gmra.mrb[0].mxu0 %v1466
        %v1852 = vpop.f32.mrb[0].mxu0
        %v1853 = vadd.f32 0.0, %v1852
        %v1854 = vpop.f32.mrb[0].mxu0
        %1855 = vmatprep.mubr.f32.mxu0 0.0
        %1856 = vmatmul.mubr.f32.gmra.mrb[0].mxu0 %v1469
        %v1857 = vpop.f32.mrb[0].mxu0
        %v1858 = vadd.f32 0.0, %v1857
        %v1859 = vpop.f32.mrb[0].mxu0
        %1860 = vmatprep.mubr.f32.mxu0 0.0
        %1861 = vmatmul.mubr.f32.gmra.mrb[0].mxu0 %v1472
        %v1862 = vpop.f32.mrb[0].mxu0
        %v1863 = vadd.f32 0.0, %v1862
        %v1864 = vpop.f32.mrb[0].mxu0
        %1865 = vmatprep.mubr.f32.mxu0 0.0
        %1866 = vmatmul.mubr.f32.gmra.mrb[0].mxu0 %v1475
        %v1867 = vpop.f32.mrb[0].mxu0
        %v1868 = vadd.f32 0.0, %v1867
        %v1869 = vpop.f32.mrb[0].mxu0
        %1870 = vmatprep.mubr.f32.mxu0 0.0
        %1871 = vmatmul.mubr.f32.gmra.mrb[0].mxu0 %v1744
        %v1872 = vpop.f32.mrb[0].mxu0
        %v1873 = vpop.f32.mrb[0].mxu0
        %1874 = vdwg.mxu0
        %v1875 = vadd.f32 %v1676, %v1813
        %v1876 = vadd.f32 %v1681, %v1818
        %v1877 = vadd.f32 %v1686, %v1823
        %v1878 = vadd.f32 %v1691, %v1828
        %v1879 = vadd.f32 %v1696, %v1833
        %v1880 = vadd.f32 %v1701, %v1838
        %v1881 = vadd.f32 %v1706, %v1843
        %v1882 = vadd.f32 %v1711, %v1848
        %v1883 = vadd.f32 %v1716, %v1853
        %v1884 = vadd.f32 %v1721, %v1858
        %v1885 = vadd.f32 %v1726, %v1863
        %v1886 = vadd.f32 %v1731, %v1868
        %v1887 = vld [vmem:[%s4] sm:$0x1]
        %v1888 = vlaneseq
        %v1889 = vshrl.u32 %v1888, 7
        %v1890 = vsub.s32 0, %v1889
        %v1891 = vrot.slane %v1887, %v1890
        %v1892 = vmul.f32 %v1875, %v1891
        %v1893 = vmul.f32 %v1876, %v1891
        %v1894 = vmul.f32 %v1877, %v1891
        %v1895 = vmul.f32 %v1878, %v1891
        %v1896 = vmul.f32 %v1879, %v1891
        %v1897 = vmul.f32 %v1880, %v1891
        %v1898 = vmul.f32 %v1881, %v1891
        %v1899 = vmul.f32 %v1882, %v1891
        %v1900 = vmul.f32 %v1883, %v1891
        %v1901 = vmul.f32 %v1884, %v1891
        %v1902 = vmul.f32 %v1885, %v1891
        %v1903 = vmul.f32 %v1886, %v1891
        %v1904 = vld [vmem:[%s4 + $0x1] sm:$0x1]
        %v1905 = vlaneseq
        %v1906 = vshrl.u32 %v1905, 7
        %v1907 = vsub.s32 0, %v1906
        %v1908 = vrot.slane %v1904, %v1907
        %v1909 = vadd.f32 %v1892, %v1908
        %v1910 = vadd.f32 %v1893, %v1908
        %v1911 = vadd.f32 %v1894, %v1908
        %v1912 = vadd.f32 %v1895, %v1908
        %v1913 = vadd.f32 %v1896, %v1908
        %v1914 = vadd.f32 %v1897, %v1908
        %v1915 = vadd.f32 %v1898, %v1908
        %v1916 = vadd.f32 %v1899, %v1908
        %v1917 = vadd.f32 %v1900, %v1908
        %v1918 = vadd.f32 %v1901, %v1908
        %v1919 = vadd.f32 %v1902, %v1908
        %v1920 = vadd.f32 %v1903, %v1908
        %v1921 = vmax.f32 %v1909, 0.0
        %v1922 = vmax.f32 %v1910, 0.0
        %v1923 = vmax.f32 %v1911, 0.0
        %v1924 = vmax.f32 %v1912, 0.0
        %v1925 = vmax.f32 %v1913, 0.0
        %v1926 = vmax.f32 %v1914, 0.0
        %v1927 = vmax.f32 %v1915, 0.0
        %v1928 = vmax.f32 %v1916, 0.0
        %v1929 = vmax.f32 %v1917, 0.0
        %v1930 = vmax.f32 %v1918, 0.0
        %v1931 = vmax.f32 %v1919, 0.0
        %v1932 = vmax.f32 %v1920, 0.0
        %v1933 = vmax.f32 %v1921, %v1922
        %v1934 = vmax.f32 %v1923, %v1924
        %v1935 = vmax.f32 %v1925, %v1926
        %v1936 = vmax.f32 %v1927, %v1928
        %v1937 = vmax.f32 %v1929, %v1930
        %v1938 = vmax.f32 %v1931, %v1932
        %v1939 = vld [vmem:[%s5] sm:$0xff]
        %v1940 = vld [vmem:[%s5 + $0x8] sm:$0xff]
        %v1941 = vld [vmem:[%s5 + $0x10] sm:$0xff]
        %v1942 = vld [vmem:[%s5 + $0x18] sm:$0xff]
        %v1943 = vld [vmem:[%s5 + $0x20] sm:$0xff]
        %v1944 = vld [vmem:[%s5 + $0x28] sm:$0xff]
        %v1945 = vld [vmem:[%s5 + $0x30] sm:$0xff]
        %v1946 = vld [vmem:[%s5 + $0x38] sm:$0xff]
        %s1947 = scalar_lea.vmem %s5, 64
        %v1948 = vld [vmem:[%s1947] sm:$0xff]
        %v1949 = vld [vmem:[%s1947 + $0x8] sm:$0xff]
        %v1950 = vld [vmem:[%s1947 + $0x10] sm:$0xff]
        %v1951 = vld [vmem:[%s1947 + $0x18] sm:$0xff]
        %v1952 = vld [vmem:[%s1947 + $0x20] sm:$0xff]
        %v1953 = vld [vmem:[%s1947 + $0x28] sm:$0xff]
        %v1954 = vld [vmem:[%s1947 + $0x30] sm:$0xff]
        %v1955 = vld [vmem:[%s1947 + $0x38] sm:$0xff]
        %vm1956 = vcmask 523264
        %v1958 = vsel %vm1956, %v1934, 0
        %1960 = vmatprep.subr.mxu0 0.0
        %1961 = vmatpush1.msra.mxu0 %v1948
        %1962 = vmatprep.subr.mxu0 0.0
        %1963 = vmatpush1.msra.mxu0 %v1949
        %1964 = vmatprep.subr.mxu0 0.0
        %1965 = vmatpush1.msra.mxu0 %v1950
        %1966 = vmatprep.subr.mxu0 0.0
        %1967 = vmatpush1.msra.mxu0 %v1951
        %1968 = vmatprep.subr.mxu0 0.0
        %1969 = vmatpush1.msra.mxu0 %v1952
        %1970 = vmatprep.subr.mxu0 0.0
        %1971 = vmatpush1.msra.mxu0 %v1953
        %1972 = vmatprep.subr.mxu0 0.0
        %1973 = vmatpush1.msra.mxu0 %v1954
        %1974 = vmatprep.subr.mxu0 0.0
        %1975 = vmatpush1.msra.mxu0 %v1955
        %1976 = vmatprep.subr.mxu0 0.0
        %1977 = vmatpush1.msra.mxu0 0.0
        %1978 = vmatprep.subr.mxu0 0.0
        %1979 = vmatpush1.msra.mxu0 0.0
        %1980 = vmatprep.subr.mxu0 0.0
        %1981 = vmatpush1.msra.mxu0 0.0
        %1982 = vmatprep.subr.mxu0 0.0
        %1983 = vmatpush1.msra.mxu0 0.0
        %1984 = vmatprep.subr.mxu0 0.0
        %1985 = vmatpush1.msra.mxu0 0.0
        %1986 = vmatprep.subr.mxu0 0.0
        %1987 = vmatpush1.msra.mxu0 0.0
        %1988 = vmatprep.subr.mxu0 0.0
        %1989 = vmatpush1.msra.mxu0 0.0
        %1990 = vmatprep.subr.mxu0 0.0
        %1991 = vmatpush1.msra.mxu0 0.0
        %1992 = vmatprep.subr.mxu0 0.0
        %1993 = vmatpush1.msra.mxu0 0.0
        %1994 = vmatprep.subr.mxu0 0.0
        %1995 = vmatpush1.msra.mxu0 0.0
        %1996 = vmatprep.subr.mxu0 0.0
        %1997 = vmatpush1.msra.mxu0 0.0
        %1998 = vmatprep.subr.mxu0 0.0
        %1999 = vmatpush1.msra.mxu0 0.0
        %2000 = vmatprep.subr.mxu0 0.0
        %2001 = vmatpush1.msra.mxu0 0.0
        %2002 = vmatprep.subr.mxu0 0.0
        %2003 = vmatpush1.msra.mxu0 0.0
        %2004 = vmatprep.subr.mxu0 0.0
        %2005 = vmatpush1.msra.mxu0 0.0
        %2006 = vmatprep.subr.mxu0 0.0
        %2007 = vmatpush1.msra.mxu0 0.0
        %2008 = vmatprep.subr.mxu0 0.0
        %2009 = vmatpush1.msra.mxu0 0.0
        %2010 = vmatprep.subr.mxu0 0.0
        %2011 = vmatpush1.msra.mxu0 0.0
        %2012 = vmatprep.subr.mxu0 0.0
        %2013 = vmatpush1.msra.mxu0 0.0
        %2014 = vmatprep.subr.mxu0 0.0
        %2015 = vmatpush1.msra.mxu0 0.0
        %2016 = vmatprep.subr.mxu0 0.0
        %2017 = vmatpush1.msra.mxu0 0.0
        %2018 = vmatprep.subr.mxu0 0.0
        %2019 = vmatpush1.msra.mxu0 0.0
        %2020 = vmatprep.subr.mxu0 0.0
        %2021 = vmatpush1.msra.mxu0 0.0
        %2022 = vmatprep.subr.mxu0 0.0
        %2023 = vmatpush1.msra.mxu0 0.0
        %2024 = vmatprep.mubr.f32.mxu0 0.0
        %2025 = vmatmul.mubr.f32.gmra.mrb[0].mxu0 %v1958
        %v2026 = vpop.f32.mrb[0].mxu0
        %v2027 = vadd.f32 0.0, %v2026
        %v2028 = vpop.f32.mrb[0].mxu0
        %2029 = vdwg.mxu0
        %v2031 = vsel %vm1956, %v1933, 0
        %2033 = vmatprep.subr.mxu0 0.0
        %2034 = vmatpush1.msra.mxu0 %v1939
        %2035 = vmatprep.subr.mxu0 0.0
        %2036 = vmatpush1.msra.mxu0 %v1940
        %2037 = vmatprep.subr.mxu0 0.0
        %2038 = vmatpush1.msra.mxu0 %v1941
        %2039 = vmatprep.subr.mxu0 0.0
        %2040 = vmatpush1.msra.mxu0 %v1942
        %2041 = vmatprep.subr.mxu0 0.0
        %2042 = vmatpush1.msra.mxu0 %v1943
        %2043 = vmatprep.subr.mxu0 0.0
        %2044 = vmatpush1.msra.mxu0 %v1944
        %2045 = vmatprep.subr.mxu0 0.0
        %2046 = vmatpush1.msra.mxu0 %v1945
        %2047 = vmatprep.subr.mxu0 0.0
        %2048 = vmatpush1.msra.mxu0 %v1946
        %2049 = vmatprep.subr.mxu0 0.0
        %2050 = vmatpush1.msra.mxu0 0.0
        %2051 = vmatprep.subr.mxu0 0.0
        %2052 = vmatpush1.msra.mxu0 0.0
        %2053 = vmatprep.subr.mxu0 0.0
        %2054 = vmatpush1.msra.mxu0 0.0
        %2055 = vmatprep.subr.mxu0 0.0
        %2056 = vmatpush1.msra.mxu0 0.0
        %2057 = vmatprep.subr.mxu0 0.0
        %2058 = vmatpush1.msra.mxu0 0.0
        %2059 = vmatprep.subr.mxu0 0.0
        %2060 = vmatpush1.msra.mxu0 0.0
        %2061 = vmatprep.subr.mxu0 0.0
        %2062 = vmatpush1.msra.mxu0 0.0
        %2063 = vmatprep.subr.mxu0 0.0
        %2064 = vmatpush1.msra.mxu0 0.0
        %2065 = vmatprep.subr.mxu0 0.0
        %2066 = vmatpush1.msra.mxu0 0.0
        %2067 = vmatprep.subr.mxu0 0.0
        %2068 = vmatpush1.msra.mxu0 0.0
        %2069 = vmatprep.subr.mxu0 0.0
        %2070 = vmatpush1.msra.mxu0 0.0
        %2071 = vmatprep.subr.mxu0 0.0
        %2072 = vmatpush1.msra.mxu0 0.0
        %2073 = vmatprep.subr.mxu0 0.0
        %2074 = vmatpush1.msra.mxu0 0.0
        %2075 = vmatprep.subr.mxu0 0.0
        %2076 = vmatpush1.msra.mxu0 0.0
        %2077 = vmatprep.subr.mxu0 0.0
        %2078 = vmatpush1.msra.mxu0 0.0
        %2079 = vmatprep.subr.mxu0 0.0
        %2080 = vmatpush1.msra.mxu0 0.0
        %2081 = vmatprep.subr.mxu0 0.0
        %2082 = vmatpush1.msra.mxu0 0.0
        %2083 = vmatprep.subr.mxu0 0.0
        %2084 = vmatpush1.msra.mxu0 0.0
        %2085 = vmatprep.subr.mxu0 0.0
        %2086 = vmatpush1.msra.mxu0 0.0
        %2087 = vmatprep.subr.mxu0 0.0
        %2088 = vmatpush1.msra.mxu0 0.0
        %2089 = vmatprep.subr.mxu0 0.0
        %2090 = vmatpush1.msra.mxu0 0.0
        %2091 = vmatprep.subr.mxu0 0.0
        %2092 = vmatpush1.msra.mxu0 0.0
        %2093 = vmatprep.subr.mxu0 0.0
        %2094 = vmatpush1.msra.mxu0 0.0
        %2095 = vmatprep.subr.mxu0 0.0
        %2096 = vmatpush1.msra.mxu0 0.0
        %2097 = vmatprep.mubr.f32.mxu0 0.0
        %2098 = vmatmul.mubr.f32.gmra.mrb[0].mxu0 %v2031
        %v2099 = vpop.f32.mrb[0].mxu0
        %v2100 = vadd.f32 %v2027, %v2099
        %v2101 = vpop.f32.mrb[0].mxu0
        %2102 = vdwg.mxu0
        %s2103 = scalar_lea.vmem %s5, 128
        %v2104 = vld [vmem:[%s2103] sm:$0xff]
        %v2105 = vld [vmem:[%s2103 + $0x8] sm:$0xff]
        %v2106 = vld [vmem:[%s2103 + $0x10] sm:$0xff]
        %v2107 = vld [vmem:[%s2103 + $0x18] sm:$0xff]
        %v2108 = vld [vmem:[%s2103 + $0x20] sm:$0xff]
        %v2109 = vld [vmem:[%s2103 + $0x28] sm:$0xff]
        %v2110 = vld [vmem:[%s2103 + $0x30] sm:$0xff]
        %v2111 = vld [vmem:[%s2103 + $0x38] sm:$0xff]
        %v2113 = vsel %vm1956, %v1935, 0
        %2115 = vmatprep.subr.mxu0 0.0
        %2116 = vmatpush1.msra.mxu0 %v2104
        %2117 = vmatprep.subr.mxu0 0.0
        %2118 = vmatpush1.msra.mxu0 %v2105
        %2119 = vmatprep.subr.mxu0 0.0
        %2120 = vmatpush1.msra.mxu0 %v2106
        %2121 = vmatprep.subr.mxu0 0.0
        %2122 = vmatpush1.msra.mxu0 %v2107
        %2123 = vmatprep.subr.mxu0 0.0
        %2124 = vmatpush1.msra.mxu0 %v2108
        %2125 = vmatprep.subr.mxu0 0.0
        %2126 = vmatpush1.msra.mxu0 %v2109
        %2127 = vmatprep.subr.mxu0 0.0
        %2128 = vmatpush1.msra.mxu0 %v2110
        %2129 = vmatprep.subr.mxu0 0.0
        %2130 = vmatpush1.msra.mxu0 %v2111
        %2131 = vmatprep.subr.mxu0 0.0
        %2132 = vmatpush1.msra.mxu0 0.0
        %2133 = vmatprep.subr.mxu0 0.0
        %2134 = vmatpush1.msra.mxu0 0.0
        %2135 = vmatprep.subr.mxu0 0.0
        %2136 = vmatpush1.msra.mxu0 0.0
        %2137 = vmatprep.subr.mxu0 0.0
        %2138 = vmatpush1.msra.mxu0 0.0
        %2139 = vmatprep.subr.mxu0 0.0
        %2140 = vmatpush1.msra.mxu0 0.0
        %2141 = vmatprep.subr.mxu0 0.0
        %2142 = vmatpush1.msra.mxu0 0.0
        %2143 = vmatprep.subr.mxu0 0.0
        %2144 = vmatpush1.msra.mxu0 0.0
        %2145 = vmatprep.subr.mxu0 0.0
        %2146 = vmatpush1.msra.mxu0 0.0
        %2147 = vmatprep.subr.mxu0 0.0
        %2148 = vmatpush1.msra.mxu0 0.0
        %2149 = vmatprep.subr.mxu0 0.0
        %2150 = vmatpush1.msra.mxu0 0.0
        %2151 = vmatprep.subr.mxu0 0.0
        %2152 = vmatpush1.msra.mxu0 0.0
        %2153 = vmatprep.subr.mxu0 0.0
        %2154 = vmatpush1.msra.mxu0 0.0
        %2155 = vmatprep.subr.mxu0 0.0
        %2156 = vmatpush1.msra.mxu0 0.0
        %2157 = vmatprep.subr.mxu0 0.0
        %2158 = vmatpush1.msra.mxu0 0.0
        %2159 = vmatprep.subr.mxu0 0.0
        %2160 = vmatpush1.msra.mxu0 0.0
        %2161 = vmatprep.subr.mxu0 0.0
        %2162 = vmatpush1.msra.mxu0 0.0
        %2163 = vmatprep.subr.mxu0 0.0
        %2164 = vmatpush1.msra.mxu0 0.0
        %2165 = vmatprep.subr.mxu0 0.0
        %2166 = vmatpush1.msra.mxu0 0.0
        %2167 = vmatprep.subr.mxu0 0.0
        %2168 = vmatpush1.msra.mxu0 0.0
        %2169 = vmatprep.subr.mxu0 0.0
        %2170 = vmatpush1.msra.mxu0 0.0
        %2171 = vmatprep.subr.mxu0 0.0
        %2172 = vmatpush1.msra.mxu0 0.0
        %2173 = vmatprep.subr.mxu0 0.0
        %2174 = vmatpush1.msra.mxu0 0.0
        %2175 = vmatprep.subr.mxu0 0.0
        %2176 = vmatpush1.msra.mxu0 0.0
        %2177 = vmatprep.subr.mxu0 0.0
        %2178 = vmatpush1.msra.mxu0 0.0
        %2179 = vmatprep.mubr.f32.mxu0 0.0
        %2180 = vmatmul.mubr.f32.gmra.mrb[0].mxu0 %v2113
        %v2181 = vpop.f32.mrb[0].mxu0
        %v2182 = vadd.f32 0.0, %v2181
        %v2183 = vpop.f32.mrb[0].mxu0
        %2184 = vdwg.mxu0
        %v2185 = vadd.f32 %v2100, %v2182
        %s2186 = scalar_lea.vmem %s5, 192
        %v2187 = vld [vmem:[%s2186] sm:$0xff]
        %v2188 = vld [vmem:[%s2186 + $0x8] sm:$0xff]
        %v2189 = vld [vmem:[%s2186 + $0x10] sm:$0xff]
        %v2190 = vld [vmem:[%s2186 + $0x18] sm:$0xff]
        %v2191 = vld [vmem:[%s2186 + $0x20] sm:$0xff]
        %v2192 = vld [vmem:[%s2186 + $0x28] sm:$0xff]
        %v2193 = vld [vmem:[%s2186 + $0x30] sm:$0xff]
        %v2194 = vld [vmem:[%s2186 + $0x38] sm:$0xff]
        %v2196 = vsel %vm1956, %v1936, 0
        %2198 = vmatprep.subr.mxu0 0.0
        %2199 = vmatpush1.msra.mxu0 %v2187
        %2200 = vmatprep.subr.mxu0 0.0
        %2201 = vmatpush1.msra.mxu0 %v2188
        %2202 = vmatprep.subr.mxu0 0.0
        %2203 = vmatpush1.msra.mxu0 %v2189
        %2204 = vmatprep.subr.mxu0 0.0
        %2205 = vmatpush1.msra.mxu0 %v2190
        %2206 = vmatprep.subr.mxu0 0.0
        %2207 = vmatpush1.msra.mxu0 %v2191
        %2208 = vmatprep.subr.mxu0 0.0
        %2209 = vmatpush1.msra.mxu0 %v2192
        %2210 = vmatprep.subr.mxu0 0.0
        %2211 = vmatpush1.msra.mxu0 %v2193
        %2212 = vmatprep.subr.mxu0 0.0
        %2213 = vmatpush1.msra.mxu0 %v2194
        %2214 = vmatprep.subr.mxu0 0.0
        %2215 = vmatpush1.msra.mxu0 0.0
        %2216 = vmatprep.subr.mxu0 0.0
        %2217 = vmatpush1.msra.mxu0 0.0
        %2218 = vmatprep.subr.mxu0 0.0
        %2219 = vmatpush1.msra.mxu0 0.0
        %2220 = vmatprep.subr.mxu0 0.0
        %2221 = vmatpush1.msra.mxu0 0.0
        %2222 = vmatprep.subr.mxu0 0.0
        %2223 = vmatpush1.msra.mxu0 0.0
        %2224 = vmatprep.subr.mxu0 0.0
        %2225 = vmatpush1.msra.mxu0 0.0
        %2226 = vmatprep.subr.mxu0 0.0
        %2227 = vmatpush1.msra.mxu0 0.0
        %2228 = vmatprep.subr.mxu0 0.0
        %2229 = vmatpush1.msra.mxu0 0.0
        %2230 = vmatprep.subr.mxu0 0.0
        %2231 = vmatpush1.msra.mxu0 0.0
        %2232 = vmatprep.subr.mxu0 0.0
        %2233 = vmatpush1.msra.mxu0 0.0
        %2234 = vmatprep.subr.mxu0 0.0
        %2235 = vmatpush1.msra.mxu0 0.0
        %2236 = vmatprep.subr.mxu0 0.0
        %2237 = vmatpush1.msra.mxu0 0.0
        %2238 = vmatprep.subr.mxu0 0.0
        %2239 = vmatpush1.msra.mxu0 0.0
        %2240 = vmatprep.subr.mxu0 0.0
        %2241 = vmatpush1.msra.mxu0 0.0
        %2242 = vmatprep.subr.mxu0 0.0
        %2243 = vmatpush1.msra.mxu0 0.0
        %2244 = vmatprep.subr.mxu0 0.0
        %2245 = vmatpush1.msra.mxu0 0.0
        %2246 = vmatprep.subr.mxu0 0.0
        %2247 = vmatpush1.msra.mxu0 0.0
        %2248 = vmatprep.subr.mxu0 0.0
        %2249 = vmatpush1.msra.mxu0 0.0
        %2250 = vmatprep.subr.mxu0 0.0
        %2251 = vmatpush1.msra.mxu0 0.0
        %2252 = vmatprep.subr.mxu0 0.0
        %2253 = vmatpush1.msra.mxu0 0.0
        %2254 = vmatprep.subr.mxu0 0.0
        %2255 = vmatpush1.msra.mxu0 0.0
        %2256 = vmatprep.subr.mxu0 0.0
        %2257 = vmatpush1.msra.mxu0 0.0
        %2258 = vmatprep.subr.mxu0 0.0
        %2259 = vmatpush1.msra.mxu0 0.0
        %2260 = vmatprep.subr.mxu0 0.0
        %2261 = vmatpush1.msra.mxu0 0.0
        %2262 = vmatprep.mubr.f32.mxu0 0.0
        %2263 = vmatmul.mubr.f32.gmra.mrb[0].mxu0 %v2196
        %v2264 = vpop.f32.mrb[0].mxu0
        %v2265 = vadd.f32 0.0, %v2264
        %v2266 = vpop.f32.mrb[0].mxu0
        %2267 = vdwg.mxu0
        %v2268 = vadd.f32 %v2185, %v2265
        %s2269 = scalar_lea.vmem %s5, 256
        %v2270 = vld [vmem:[%s2269] sm:$0xff]
        %v2271 = vld [vmem:[%s2269 + $0x8] sm:$0xff]
        %v2272 = vld [vmem:[%s2269 + $0x10] sm:$0xff]
        %v2273 = vld [vmem:[%s2269 + $0x18] sm:$0xff]
        %v2274 = vld [vmem:[%s2269 + $0x20] sm:$0xff]
        %v2275 = vld [vmem:[%s2269 + $0x28] sm:$0xff]
        %v2276 = vld [vmem:[%s2269 + $0x30] sm:$0xff]
        %v2277 = vld [vmem:[%s2269 + $0x38] sm:$0xff]
        %v2279 = vsel %vm1956, %v1937, 0
        %2281 = vmatprep.subr.mxu0 0.0
        %2282 = vmatpush1.msra.mxu0 %v2270
        %2283 = vmatprep.subr.mxu0 0.0
        %2284 = vmatpush1.msra.mxu0 %v2271
        %2285 = vmatprep.subr.mxu0 0.0
        %2286 = vmatpush1.msra.mxu0 %v2272
        %2287 = vmatprep.subr.mxu0 0.0
        %2288 = vmatpush1.msra.mxu0 %v2273
        %2289 = vmatprep.subr.mxu0 0.0
        %2290 = vmatpush1.msra.mxu0 %v2274
        %2291 = vmatprep.subr.mxu0 0.0
        %2292 = vmatpush1.msra.mxu0 %v2275
        %2293 = vmatprep.subr.mxu0 0.0
        %2294 = vmatpush1.msra.mxu0 %v2276
        %2295 = vmatprep.subr.mxu0 0.0
        %2296 = vmatpush1.msra.mxu0 %v2277
        %2297 = vmatprep.subr.mxu0 0.0
        %2298 = vmatpush1.msra.mxu0 0.0
        %2299 = vmatprep.subr.mxu0 0.0
        %2300 = vmatpush1.msra.mxu0 0.0
        %2301 = vmatprep.subr.mxu0 0.0
        %2302 = vmatpush1.msra.mxu0 0.0
        %2303 = vmatprep.subr.mxu0 0.0
        %2304 = vmatpush1.msra.mxu0 0.0
        %2305 = vmatprep.subr.mxu0 0.0
        %2306 = vmatpush1.msra.mxu0 0.0
        %2307 = vmatprep.subr.mxu0 0.0
        %2308 = vmatpush1.msra.mxu0 0.0
        %2309 = vmatprep.subr.mxu0 0.0
        %2310 = vmatpush1.msra.mxu0 0.0
        %2311 = vmatprep.subr.mxu0 0.0
        %2312 = vmatpush1.msra.mxu0 0.0
        %2313 = vmatprep.subr.mxu0 0.0
        %2314 = vmatpush1.msra.mxu0 0.0
        %2315 = vmatprep.subr.mxu0 0.0
        %2316 = vmatpush1.msra.mxu0 0.0
        %2317 = vmatprep.subr.mxu0 0.0
        %2318 = vmatpush1.msra.mxu0 0.0
        %2319 = vmatprep.subr.mxu0 0.0
        %2320 = vmatpush1.msra.mxu0 0.0
        %2321 = vmatprep.subr.mxu0 0.0
        %2322 = vmatpush1.msra.mxu0 0.0
        %2323 = vmatprep.subr.mxu0 0.0
        %2324 = vmatpush1.msra.mxu0 0.0
        %2325 = vmatprep.subr.mxu0 0.0
        %2326 = vmatpush1.msra.mxu0 0.0
        %2327 = vmatprep.subr.mxu0 0.0
        %2328 = vmatpush1.msra.mxu0 0.0
        %2329 = vmatprep.subr.mxu0 0.0
        %2330 = vmatpush1.msra.mxu0 0.0
        %2331 = vmatprep.subr.mxu0 0.0
        %2332 = vmatpush1.msra.mxu0 0.0
        %2333 = vmatprep.subr.mxu0 0.0
        %2334 = vmatpush1.msra.mxu0 0.0
        %2335 = vmatprep.subr.mxu0 0.0
        %2336 = vmatpush1.msra.mxu0 0.0
        %2337 = vmatprep.subr.mxu0 0.0
        %2338 = vmatpush1.msra.mxu0 0.0
        %2339 = vmatprep.subr.mxu0 0.0
        %2340 = vmatpush1.msra.mxu0 0.0
        %2341 = vmatprep.subr.mxu0 0.0
        %2342 = vmatpush1.msra.mxu0 0.0
        %2343 = vmatprep.subr.mxu0 0.0
        %2344 = vmatpush1.msra.mxu0 0.0
        %2345 = vmatprep.mubr.f32.mxu0 0.0
        %2346 = vmatmul.mubr.f32.gmra.mrb[0].mxu0 %v2279
        %v2347 = vpop.f32.mrb[0].mxu0
        %v2348 = vadd.f32 0.0, %v2347
        %v2349 = vpop.f32.mrb[0].mxu0
        %2350 = vdwg.mxu0
        %v2351 = vadd.f32 %v2268, %v2348
        %s2352 = scalar_lea.vmem %s5, 320
        %v2353 = vld [vmem:[%s2352] sm:$0xff]
        %v2354 = vld [vmem:[%s2352 + $0x8] sm:$0xff]
        %v2355 = vld [vmem:[%s2352 + $0x10] sm:$0xff]
        %v2356 = vld [vmem:[%s2352 + $0x18] sm:$0xff]
        %v2357 = vld [vmem:[%s2352 + $0x20] sm:$0xff]
        %v2358 = vld [vmem:[%s2352 + $0x28] sm:$0xff]
        %v2359 = vld [vmem:[%s2352 + $0x30] sm:$0xff]
        %v2360 = vld [vmem:[%s2352 + $0x38] sm:$0xff]
        %v2362 = vsel %vm1956, %v1938, 0
        %2364 = vmatprep.subr.mxu0 0.0
        %2365 = vmatpush1.msra.mxu0 %v2353
        %2366 = vmatprep.subr.mxu0 0.0
        %2367 = vmatpush1.msra.mxu0 %v2354
        %2368 = vmatprep.subr.mxu0 0.0
        %2369 = vmatpush1.msra.mxu0 %v2355
        %2370 = vmatprep.subr.mxu0 0.0
        %2371 = vmatpush1.msra.mxu0 %v2356
        %2372 = vmatprep.subr.mxu0 0.0
        %2373 = vmatpush1.msra.mxu0 %v2357
        %2374 = vmatprep.subr.mxu0 0.0
        %2375 = vmatpush1.msra.mxu0 %v2358
        %2376 = vmatprep.subr.mxu0 0.0
        %2377 = vmatpush1.msra.mxu0 %v2359
        %2378 = vmatprep.subr.mxu0 0.0
        %2379 = vmatpush1.msra.mxu0 %v2360
        %2380 = vmatprep.subr.mxu0 0.0
        %2381 = vmatpush1.msra.mxu0 0.0
        %2382 = vmatprep.subr.mxu0 0.0
        %2383 = vmatpush1.msra.mxu0 0.0
        %2384 = vmatprep.subr.mxu0 0.0
        %2385 = vmatpush1.msra.mxu0 0.0
        %2386 = vmatprep.subr.mxu0 0.0
        %2387 = vmatpush1.msra.mxu0 0.0
        %2388 = vmatprep.subr.mxu0 0.0
        %2389 = vmatpush1.msra.mxu0 0.0
        %2390 = vmatprep.subr.mxu0 0.0
        %2391 = vmatpush1.msra.mxu0 0.0
        %2392 = vmatprep.subr.mxu0 0.0
        %2393 = vmatpush1.msra.mxu0 0.0
        %2394 = vmatprep.subr.mxu0 0.0
        %2395 = vmatpush1.msra.mxu0 0.0
        %2396 = vmatprep.subr.mxu0 0.0
        %2397 = vmatpush1.msra.mxu0 0.0
        %2398 = vmatprep.subr.mxu0 0.0
        %2399 = vmatpush1.msra.mxu0 0.0
        %2400 = vmatprep.subr.mxu0 0.0
        %2401 = vmatpush1.msra.mxu0 0.0
        %2402 = vmatprep.subr.mxu0 0.0
        %2403 = vmatpush1.msra.mxu0 0.0
        %2404 = vmatprep.subr.mxu0 0.0
        %2405 = vmatpush1.msra.mxu0 0.0
        %2406 = vmatprep.subr.mxu0 0.0
        %2407 = vmatpush1.msra.mxu0 0.0
        %2408 = vmatprep.subr.mxu0 0.0
        %2409 = vmatpush1.msra.mxu0 0.0
        %2410 = vmatprep.subr.mxu0 0.0
        %2411 = vmatpush1.msra.mxu0 0.0
        %2412 = vmatprep.subr.mxu0 0.0
        %2413 = vmatpush1.msra.mxu0 0.0
        %2414 = vmatprep.subr.mxu0 0.0
        %2415 = vmatpush1.msra.mxu0 0.0
        %2416 = vmatprep.subr.mxu0 0.0
        %2417 = vmatpush1.msra.mxu0 0.0
        %2418 = vmatprep.subr.mxu0 0.0
        %2419 = vmatpush1.msra.mxu0 0.0
        %2420 = vmatprep.subr.mxu0 0.0
        %2421 = vmatpush1.msra.mxu0 0.0
        %2422 = vmatprep.subr.mxu0 0.0
        %2423 = vmatpush1.msra.mxu0 0.0
        %2424 = vmatprep.subr.mxu0 0.0
        %2425 = vmatpush1.msra.mxu0 0.0
        %2426 = vmatprep.subr.mxu0 0.0
        %2427 = vmatpush1.msra.mxu0 0.0
        %2428 = vmatprep.mubr.f32.mxu0 0.0
        %2429 = vmatmul.mubr.f32.gmra.mrb[0].mxu0 %v2362
        %v2430 = vpop.f32.mrb[0].mxu0
        %v2431 = vadd.f32 0.0, %v2430
        %v2432 = vpop.f32.mrb[0].mxu0
        %2433 = vdwg.mxu0
        %v2434 = vadd.f32 %v2351, %v2431
        %v2435 = vld [vmem:[%s6] sm:$0x1]
        %v2437 = vlaneseq
        %v2438 = vshrl.u32 %v2437, 7
        %v2439 = vsub.s32 0, %v2438
        %v2440 = vrot.slane %v2435, %v2439
        %v2442 = vadd.f32 %v2434, %v2440
        %v2443 = vmax.f32 %v2442, 0.0
        %v2444 = vld [vmem:[%s7] sm:$0xff]
        %v2445 = vld [vmem:[%s7 + $0x8] sm:$0xff]
        %v2446 = vld [vmem:[%s7 + $0x10] sm:$0xff]
        %v2447 = vld [vmem:[%s7 + $0x18] sm:$0xff]
        %v2448 = vld [vmem:[%s7 + $0x20] sm:$0xff]
        %v2449 = vld [vmem:[%s7 + $0x28] sm:$0xff]
        %v2450 = vld [vmem:[%s7 + $0x30] sm:$0xff]
        %v2451 = vld [vmem:[%s7 + $0x38] sm:$0xff]
        %v2452 = vld [vmem:[%s7 + $0x40] sm:$0xff]
        %v2453 = vld [vmem:[%s7 + $0x48] sm:$0xff]
        %v2454 = vld [vmem:[%s7 + $0x50] sm:$0xff]
        %v2455 = vld [vmem:[%s7 + $0x58] sm:$0xff]
        %v2456 = vld [vmem:[%s7 + $0x60] sm:$0xf]
        %v2457 = vld [vmem:[#allocation2] sm:$0x1]
        %v2459 = vlaneseq
        %v2460 = vshrl.u32 %v2459, 7
        %v2461 = vsub.s32 0, %v2460
        %v2462 = vrot.slane %v2457, %v2461
        %vm2464 = vcmask 818176
        %v2466 = vsel %vm2464, %v2443, 0
        %v2469 = vsel %vm619, %v2456, 0
        %2471 = vmatprep.subr.mxu0 0.0
        %2472 = vmatpush1.msra.mxu0 %v2444
        %2473 = vmatprep.subr.mxu0 0.0
        %2474 = vmatpush1.msra.mxu0 %v2445
        %2475 = vmatprep.subr.mxu0 0.0
        %2476 = vmatpush1.msra.mxu0 %v2446
        %2477 = vmatprep.subr.mxu0 0.0
        %2478 = vmatpush1.msra.mxu0 %v2447
        %2479 = vmatprep.subr.mxu0 0.0
        %2480 = vmatpush1.msra.mxu0 %v2448
        %2481 = vmatprep.subr.mxu0 0.0
        %2482 = vmatpush1.msra.mxu0 %v2449
        %2483 = vmatprep.subr.mxu0 0.0
        %2484 = vmatpush1.msra.mxu0 %v2450
        %2485 = vmatprep.subr.mxu0 0.0
        %2486 = vmatpush1.msra.mxu0 %v2451
        %2487 = vmatprep.subr.mxu0 0.0
        %2488 = vmatpush1.msra.mxu0 %v2452
        %2489 = vmatprep.subr.mxu0 0.0
        %2490 = vmatpush1.msra.mxu0 %v2453
        %2491 = vmatprep.subr.mxu0 0.0
        %2492 = vmatpush1.msra.mxu0 %v2454
        %2493 = vmatprep.subr.mxu0 0.0
        %2494 = vmatpush1.msra.mxu0 %v2455
        %2495 = vmatprep.subr.mxu0 0.0
        %2496 = vmatpush1.msra.mxu0 %v2469
        %2497 = vmatprep.subr.mxu0 0.0
        %2498 = vmatpush1.msra.mxu0 0.0
        %2499 = vmatprep.subr.mxu0 0.0
        %2500 = vmatpush1.msra.mxu0 0.0
        %2501 = vmatprep.subr.mxu0 0.0
        %2502 = vmatpush1.msra.mxu0 0.0
        %2503 = vmatprep.subr.mxu0 0.0
        %2504 = vmatpush1.msra.mxu0 0.0
        %2505 = vmatprep.subr.mxu0 0.0
        %2506 = vmatpush1.msra.mxu0 0.0
        %2507 = vmatprep.subr.mxu0 0.0
        %2508 = vmatpush1.msra.mxu0 0.0
        %2509 = vmatprep.subr.mxu0 0.0
        %2510 = vmatpush1.msra.mxu0 0.0
        %2511 = vmatprep.subr.mxu0 0.0
        %2512 = vmatpush1.msra.mxu0 0.0
        %2513 = vmatprep.subr.mxu0 0.0
        %2514 = vmatpush1.msra.mxu0 0.0
        %2515 = vmatprep.subr.mxu0 0.0
        %2516 = vmatpush1.msra.mxu0 0.0
        %2517 = vmatprep.subr.mxu0 0.0
        %2518 = vmatpush1.msra.mxu0 0.0
        %2519 = vmatprep.subr.mxu0 0.0
        %2520 = vmatpush1.msra.mxu0 0.0
        %2521 = vmatprep.subr.mxu0 0.0
        %2522 = vmatpush1.msra.mxu0 0.0
        %2523 = vmatprep.subr.mxu0 0.0
        %2524 = vmatpush1.msra.mxu0 0.0
        %2525 = vmatprep.subr.mxu0 0.0
        %2526 = vmatpush1.msra.mxu0 0.0
        %2527 = vmatprep.subr.mxu0 0.0
        %2528 = vmatpush1.msra.mxu0 0.0
        %2529 = vmatprep.subr.mxu0 0.0
        %2530 = vmatpush1.msra.mxu0 0.0
        %2531 = vmatprep.subr.mxu0 0.0
        %2532 = vmatpush1.msra.mxu0 0.0
        %2533 = vmatprep.subr.mxu0 0.0
        %2534 = vmatpush1.msra.mxu0 0.0
        %2535 = vmatprep.mubr.f32.mxu0 0.0
        %2536 = vmatmul.mubr.f32.gmra.mrb[0].mxu0 %v2466
        %v2537 = vpop.f32.mrb[0].mxu0
        %v2538 = vadd.f32 %v2462, %v2537
        %v2539 = vpop.f32.mrb[0].mxu0
        %2540 = vdwg.mxu0
        %vm2541 = vcmask 7168
        %2542 = vst.msk [vmem:[%s490] sm:$0xff] %vm2541, %v2538
        %p2543 = scmp.lt.s32.totalorder %s22, 1
        %s2544 = scalar_select %p2543, %s22, 1
        %s2545 = smul.addr %s2544, 8
        %s2546 = scalar_lea.vmem %s9, %s2545
        // Predicated region
        $region95: #{tpu_custom_call.1} parent=89 // pred_check
          %p2547 = pneg %p234
        $region96: #{tpu_custom_call.1} parent=89 // pred_check_branch
          %2549 = sbr.rel (%p2547) target = $region98
        $region97: #{tpu_custom_call.1} parent=89 // pred_region
          _
        $region98: #{tpu_custom_call.1} parent=89 // pred_fallthru
          _
      $region90: #{tpu_custom_call.1} parent=5 // pred_fallthru
        _
      %p2550 = scmp.le.s32.totalorder 2, %s17
      // Predicated region
      $region99: #{tpu_custom_call.1} parent=5 // pred_check
        %p2551 = pneg %p2550
      $region100: #{tpu_custom_call.1} parent=5 // pred_check_branch
        %2553 = sbr.rel (%p2551) target = $region102
      $region101: #{tpu_custom_call.1} parent=5 // pred_region
        %s2554 = ssub.s32 %s17, 2
        // Predicated region
        $region103: #{tpu_custom_call.1} parent=101 // pred_check
          %p2555 = pneg %p240
        $region104: #{tpu_custom_call.1} parent=101 // pred_check_branch
          %2557 = sbr.rel (%p2555) target = $region106
        $region105: #{tpu_custom_call.1} parent=101 // pred_region
          %p2558 = scmp.lt.s32.totalorder %s23, 1
          %s2559 = scalar_select %p2558, %s23, 1
          %s2560 = smul.addr %s2559, 8
          %s2561 = scalar_lea.vmem %s9, %s2560
        $region106: #{tpu_custom_call.1} parent=101 // pred_fallthru
          _
      $region102: #{tpu_custom_call.1} parent=5 // pred_fallthru
        _
    $region6: #{tpu_custom_call.1} parent=1 // loop_footer
      %s21 = sadd.s32 1, %s17
    $region7: #{tpu_custom_call.1} parent=1 // loop_footer_branch
      %16 = sbr.rel target = $region3
    $region8: #{tpu_custom_call.1} parent=1 // loop_exit
      _

</llo_original>
